<compile_context>
chip_gen: v6e
topology: v6e:2x2x1
jax: 0.10.0
libtpu: 0.0.40
codegen_flags: <defaults>
</compile_context>

<pallas_src>
import numpy as np
import jax
import jax.numpy as jnp
from jax import lax
from jax.experimental import pallas as pl
from jax.experimental.pallas import tpu as pltpu


# -----------------------------------------------------------------------------
# One-time weight packing (host / XLA side, zero per-step cost)
# -----------------------------------------------------------------------------
def _conv1_toeplitz_idx():
    """Gather indices for the (160, 256) conv1 Toeplitz matrix.

    Row r = kh*32 + w matches the in-kernel patch matrix A[p, kh*32+w] =
    x[2p(+1)+kh, w].  Columns: [0,84) hold conv output at even width (2*jj),
    [128,212) at odd width (2*jj+1), lane = jj*6 + co.  Sentinel index 150
    points at a trailing zero, giving zero padding for free.
    """
    sent = 6 * 1 * 5 * 5
    idx = np.full((5 * 32, 256), sent, dtype=np.int32)
    for kh in range(5):
        for jj in range(14):
            for kw in range(5):
                for co in range(6):
                    fi = (co * 5 + kh) * 5 + kw          # w1.reshape(-1) index
                    idx[kh * 32 + 2 * jj + kw, jj * 6 + co] = fi
                    idx[kh * 32 + 2 * jj + 1 + kw, 128 + jj * 6 + co] = fi
    return idx


def _conv2_toeplitz_idx():
    """Gather indices for the (448, 256) conv2 Toeplitz matrix.

    Row r = kh*84 + w*6 + ci matches A2[p, kh*84 + l] = pool1[2p(+1)+kh, l]
    with pool1 lane layout l = w*6 + ci (rows 420..447 are zero pad so the
    contraction dim is a multiple of 8).  Columns: [0,80) even output width,
    [128,208) odd output width, lane = jj*16 + co.
    """
    sent = 16 * 6 * 5 * 5
    idx = np.full((448, 256), sent, dtype=np.int32)
    for kh in range(5):
        for jj in range(5):
            for kw in range(5):
                for ci in range(6):
                    for co in range(16):
                        fi = ((co * 6 + ci) * 5 + kh) * 5 + kw
                        idx[kh * 84 + (2 * jj + kw) * 6 + ci, jj * 16 + co] = fi
                        idx[kh * 84 + (2 * jj + 1 + kw) * 6 + ci,
                            128 + jj * 16 + co] = fi
    return idx


_IDX1 = _conv1_toeplitz_idx()
_IDX2 = _conv2_toeplitz_idx()


def prepare_params(p):
    """Pack PyTorch-layout parameters into lane-dense, kernel-ready matrices."""
    f32 = jnp.float32
    w1f = jnp.concatenate([p["w1"].astype(f32).reshape(-1), jnp.zeros((1,), f32)])
    w2f = jnp.concatenate([p["w2"].astype(f32).reshape(-1), jnp.zeros((1,), f32)])
    W1 = jnp.take(w1f, jnp.asarray(_IDX1))                        # (160, 256)
    W2 = jnp.take(w2f, jnp.asarray(_IDX2))                        # (448, 256)

    b1t = jnp.tile(p["b1"].astype(f32), 14)                       # (84,)
    b1 = jnp.zeros((1, 256), f32).at[0, 0:84].set(b1t).at[0, 128:212].set(b1t)
    b2t = jnp.tile(p["b2"].astype(f32), 5)                        # (80,)
    b2 = jnp.zeros((1, 256), f32).at[0, 0:80].set(b2t).at[0, 128:208].set(b2t)

    # FC1: fold PyTorch's NCHW flatten order (c, h, w) and our (h, w*16+c)
    # activation layout into the weight matrix (done once, zero runtime cost).
    wf1 = p["wf1"].astype(f32).reshape(120, 16, 5, 5)             # (k, c, h, w)
    wf1 = jnp.transpose(wf1, (2, 3, 1, 0)).reshape(5, 80, 120)    # (h, w*16+c, k)
    WF1 = jnp.pad(wf1, ((0, 0), (0, 0), (0, 8)))                  # (5, 80, 128)
    bf1 = jnp.pad(p["bf1"].astype(f32), (0, 8)).reshape(1, 128)

    WF2 = jnp.pad(p["wf2"].astype(f32).T, ((0, 8), (0, 44)))      # (128, 128)
    bf2 = jnp.pad(p["bf2"].astype(f32), (0, 44)).reshape(1, 128)
    WF3 = jnp.pad(p["wf3"].astype(f32).T, ((0, 44), (0, 118)))    # (128, 128)
    bf3 = jnp.pad(p["bf3"].astype(f32), (0, 118)).reshape(1, 128)
    return dict(W1=W1, b1=b1, W2=W2, b2=b2, WF1=WF1, bf1=bf1,
                WF2=WF2, bf2=bf2, WF3=WF3, bf3=bf3)


# -----------------------------------------------------------------------------
# Fused Pallas kernel: whole network for one image per grid step
# -----------------------------------------------------------------------------
def _lenet_kernel(x_ref, w1_ref, b1_ref, w2_ref, b2_ref,
                  wf1_ref, bf1_ref, wf2_ref, bf2_ref, wf3_ref, bf3_ref,
                  o_ref, p1_ref):
    f32 = jnp.float32

    # --- conv1 (5x5, 1->6) + ReLU + 2x2 max-pool, fused ----------------------
    # Even/odd conv-output rows come from stride-2 sublane loads; even/odd
    # conv-output columns live in the two 128-lane halves of W1.
    a_ev = jnp.concatenate(
        [x_ref[pl.ds(kh, 14, stride=2), :] for kh in range(5)], axis=1)
    a_od = jnp.concatenate(
        [x_ref[pl.ds(kh + 1, 14, stride=2), :] for kh in range(5)], axis=1)
    w1 = w1_ref[...]
    b1 = b1_ref[...]
    ye = jnp.maximum(jnp.dot(a_ev, w1, preferred_element_type=f32) + b1, 0.0)
    yo = jnp.maximum(jnp.dot(a_od, w1, preferred_element_type=f32) + b1, 0.0)
    pool1 = jnp.maximum(jnp.maximum(ye[:, 0:84], ye[:, 128:212]),
                        jnp.maximum(yo[:, 0:84], yo[:, 128:212]))   # (14, 84)
    p1_ref[...] = pool1                                             # stays in VMEM

    # --- conv2 (5x5, 6->16) + ReLU + 2x2 max-pool, fused ---------------------
    kpad = jnp.zeros((5, 28), f32)                                  # K: 420 -> 448
    a2_ev = jnp.concatenate(
        [p1_ref[pl.ds(kh, 5, stride=2), :] for kh in range(5)] + [kpad], axis=1)
    a2_od = jnp.concatenate(
        [p1_ref[pl.ds(kh + 1, 5, stride=2), :] for kh in range(5)] + [kpad], axis=1)
    w2 = w2_ref[...]
    b2 = b2_ref[...]
    y2e = jnp.maximum(jnp.dot(a2_ev, w2, preferred_element_type=f32) + b2, 0.0)
    y2o = jnp.maximum(jnp.dot(a2_od, w2, preferred_element_type=f32) + b2, 0.0)
    pool2 = jnp.maximum(jnp.maximum(y2e[:, 0:80], y2e[:, 128:208]),
                        jnp.maximum(y2o[:, 0:80], y2o[:, 128:208]))  # (5, 80)

    # --- FC1 (PyTorch flatten folded into WF1) + ReLU -------------------------
    acc = jnp.zeros((1, 128), f32)
    for h in range(5):
        acc = acc + jnp.dot(pool2[h:h + 1, :], wf1_ref[h],
                            preferred_element_type=f32)
    z1 = jnp.maximum(acc + bf1_ref[...], 0.0)                        # (1, 128)

    # --- FC2 + ReLU, FC3 + ReLU ------------------------------------------------
    z2 = jnp.maximum(jnp.dot(z1, wf2_ref[...], preferred_element_type=f32)
                     + bf2_ref[...], 0.0)
    z3 = jnp.maximum(jnp.dot(z2, wf3_ref[...], preferred_element_type=f32)
                     + bf3_ref[...], 0.0)
    o_ref[...] = z3                                                  # lane-dense store


def net_forward(x_nchw, packed):
    """Full Net.forward.  x_nchw: (N, 1, 32, 32) f32.  Returns (N, 10)."""
    N = x_nchw.shape[0]
    x = x_nchw.reshape(N, 32, 32).astype(jnp.float32)   # squeeze C=1 (free)

    def _const(shape):
        return pl.BlockSpec(shape, lambda b, _s=shape: (0,) * len(_s))

    out = pl.pallas_call(
        _lenet_kernel,
        out_shape=jax.ShapeDtypeStruct((N, 1, 128), jnp.float32),
        grid=(N,),
        in_specs=[
            pl.BlockSpec((None, 32, 32), lambda b: (b, 0, 0)),   # one image/step
            _const((160, 256)), _const((1, 256)),    # conv1 Toeplitz / bias
            _const((448, 256)), _const((1, 256)),    # conv2 Toeplitz / bias
            _const((5, 80, 128)), _const((1, 128)),  # fc1 (flatten folded) / bias
            _const((128, 128)), _const((1, 128)),    # fc2 / bias
            _const((128, 128)), _const((1, 128)),    # fc3 / bias
        ],
        out_specs=pl.BlockSpec((None, 1, 128), lambda b: (b, 0, 0)),
        scratch_shapes=[pltpu.VMEM((14, 84), jnp.float32)],
        compiler_params=pltpu.CompilerParams(dimension_semantics=("parallel",)),
    )(x, packed["W1"], packed["b1"], packed["W2"], packed["b2"],
      packed["WF1"], packed["bf1"], packed["WF2"], packed["bf2"],
      packed["WF3"], packed["bf3"])
    # TODO(synk): for large batches, process several images per grid step to
    # amortize the ~0.35us per-step overhead.
    return out.reshape(N, 128)[:, :10]


# -----------------------------------------------------------------------------
# Pure-JAX reference (correctness check) and parameter init
# -----------------------------------------------------------------------------
def reference_forward(x_nchw, params):
    dn = ("NCHW", "OIHW", "NCHW")
    y = lax.conv_general_dilated(x_nchw, params["w1"], (1, 1), "VALID",
                                 dimension_numbers=dn)
    y = jnp.maximum(y + params["b1"][None, :, None, None], 0.0)
    y = lax.reduce_window(y, -jnp.inf, lax.max, (1, 1, 2, 2), (1, 1, 2, 2), "VALID")
    y = lax.conv_general_dilated(y, params["w2"], (1, 1), "VALID",
                                 dimension_numbers=dn)
    y = jnp.maximum(y + params["b2"][None, :, None, None], 0.0)
    y = lax.reduce_window(y, -jnp.inf, lax.max, (1, 1, 2, 2), (1, 1, 2, 2), "VALID")
    y = y.reshape(y.shape[0], -1)
    y = jnp.maximum(y @ params["wf1"].T + params["bf1"], 0.0)
    y = jnp.maximum(y @ params["wf2"].T + params["bf2"], 0.0)
    y = jnp.maximum(y @ params["wf3"].T + params["bf3"], 0.0)
    return y


def init_params(key):
    ks = jax.random.split(key, 10)
    s = 0.1
    return {
        "w1": jax.random.normal(ks[0], (6, 1, 5, 5), jnp.float32) * s,
        "b1": jax.random.normal(ks[1], (6,), jnp.float32) * s,
        "w2": jax.random.normal(ks[2], (16, 6, 5, 5), jnp.float32) * s,
        "b2": jax.random.normal(ks[3], (16,), jnp.float32) * s,
        "wf1": jax.random.normal(ks[4], (120, 16 * 5 * 5), jnp.float32) * s,
        "bf1": jax.random.normal(ks[5], (120,), jnp.float32) * s,
        "wf2": jax.random.normal(ks[6], (84, 120), jnp.float32) * s,
        "bf2": jax.random.normal(ks[7], (84,), jnp.float32) * s,
        "wf3": jax.random.normal(ks[8], (10, 84), jnp.float32) * s,
        "bf3": jax.random.normal(ks[9], (10,), jnp.float32) * s,
    }


if __name__ == "__main__":
    key = jax.random.PRNGKey(0)
    k_x, k_p = jax.random.split(key)
    # LeNet geometry: 32x32 single-channel input (required by the 16*5*5 FC).
    x = jax.random.normal(k_x, (2, 1, 32, 32), jnp.float32)
    params = init_params(k_p)
    packed = prepare_params(params)      # one-time weight packing (outside jit)

    fwd = jax.jit(net_forward)
    out = jax.block_until_ready(fwd(x, packed))
    assert out.shape == (2, 10), out.shape

    ref = reference_forward(x, params)
    err = float(jnp.max(jnp.abs(out - ref)))
    assert jnp.allclose(out, ref, atol=1e-3, rtol=1e-3), ("mismatch vs ref", err)

    print("KERNEL_OK")
</pallas_src>

<mosaic_0001>
module attributes {stable_mosaic.version = 11 : i64} {
  func.func @_lenet_kernel(%arg0: i32, %arg1: memref<1x32x32xf32, #tpu.memory_space<vmem>>, %arg2: memref<160x256xf32, #tpu.memory_space<vmem>>, %arg3: memref<1x256xf32, #tpu.memory_space<vmem>>, %arg4: memref<448x256xf32, #tpu.memory_space<vmem>>, %arg5: memref<1x256xf32, #tpu.memory_space<vmem>>, %arg6: memref<5x80x128xf32, #tpu.memory_space<vmem>>, %arg7: memref<1x128xf32, #tpu.memory_space<vmem>>, %arg8: memref<128x128xf32, #tpu.memory_space<vmem>>, %arg9: memref<1x128xf32, #tpu.memory_space<vmem>>, %arg10: memref<128x128xf32, #tpu.memory_space<vmem>>, %arg11: memref<1x128xf32, #tpu.memory_space<vmem>>, %arg12: memref<1x1x128xf32, #tpu.memory_space<vmem>>, %arg13: memref<14x84xf32, #tpu.memory_space<vmem>>) attributes {dimension_semantics = [#tpu.dimension_semantics<parallel>], iteration_bounds = array<i64: 2>, scalar_prefetch = 0 : i64, scratch_operands = 1 : i64, tpu.core_type = #tpu.core_type<tc>, window_params = [{transform_indices = @transform_0, window_bounds = array<i64: 1, 32, 32>}, {pipeline_mode = #tpu.pipeline_mode<synchronous>, transform_indices = @transform_1, window_bounds = array<i64: 160, 256>}, {pipeline_mode = #tpu.pipeline_mode<synchronous>, transform_indices = @transform_2, window_bounds = array<i64: 1, 256>}, {pipeline_mode = #tpu.pipeline_mode<synchronous>, transform_indices = @transform_3, window_bounds = array<i64: 448, 256>}, {pipeline_mode = #tpu.pipeline_mode<synchronous>, transform_indices = @transform_4, window_bounds = array<i64: 1, 256>}, {pipeline_mode = #tpu.pipeline_mode<synchronous>, transform_indices = @transform_5, window_bounds = array<i64: 5, 80, 128>}, {pipeline_mode = #tpu.pipeline_mode<synchronous>, transform_indices = @transform_6, window_bounds = array<i64: 1, 128>}, {pipeline_mode = #tpu.pipeline_mode<synchronous>, transform_indices = @transform_7, window_bounds = array<i64: 128, 128>}, {pipeline_mode = #tpu.pipeline_mode<synchronous>, transform_indices = @transform_8, window_bounds = array<i64: 1, 128>}, {pipeline_mode = #tpu.pipeline_mode<synchronous>, transform_indices = @transform_9, window_bounds = array<i64: 128, 128>}, {pipeline_mode = #tpu.pipeline_mode<synchronous>, transform_indices = @transform_10, window_bounds = array<i64: 1, 128>}, {transform_indices = @transform_11, window_bounds = array<i64: 1, 1, 128>}]} {
    %c0 = arith.constant 0 : index
    %c0_0 = arith.constant 0 : index
    %c0_1 = arith.constant 0 : index
    %0 = tpu.strided_load %arg1[%c0, %c0_0, %c0_1] {strides = array<i32: 1, 2, 1>} : memref<1x32x32xf32, #tpu.memory_space<vmem>>, vector<1x14x32xf32>
    %1 = vector.shape_cast %0 : vector<1x14x32xf32> to vector<14x32xf32>
    %c0_2 = arith.constant 0 : index
    %c1 = arith.constant 1 : index
    %c0_3 = arith.constant 0 : index
    %2 = tpu.strided_load %arg1[%c0_2, %c1, %c0_3] {strides = array<i32: 1, 2, 1>} : memref<1x32x32xf32, #tpu.memory_space<vmem>>, vector<1x14x32xf32>
    %3 = vector.shape_cast %2 : vector<1x14x32xf32> to vector<14x32xf32>
    %c0_4 = arith.constant 0 : index
    %c2 = arith.constant 2 : index
    %c0_5 = arith.constant 0 : index
    %4 = tpu.strided_load %arg1[%c0_4, %c2, %c0_5] {strides = array<i32: 1, 2, 1>} : memref<1x32x32xf32, #tpu.memory_space<vmem>>, vector<1x14x32xf32>
    %5 = vector.shape_cast %4 : vector<1x14x32xf32> to vector<14x32xf32>
    %c0_6 = arith.constant 0 : index
    %c3 = arith.constant 3 : index
    %c0_7 = arith.constant 0 : index
    %6 = tpu.strided_load %arg1[%c0_6, %c3, %c0_7] {strides = array<i32: 1, 2, 1>} : memref<1x32x32xf32, #tpu.memory_space<vmem>>, vector<1x14x32xf32>
    %7 = vector.shape_cast %6 : vector<1x14x32xf32> to vector<14x32xf32>
    %c0_8 = arith.constant 0 : index
    %c4 = arith.constant 4 : index
    %c0_9 = arith.constant 0 : index
    %8 = tpu.strided_load %arg1[%c0_8, %c4, %c0_9] {strides = array<i32: 1, 2, 1>} : memref<1x32x32xf32, #tpu.memory_space<vmem>>, vector<1x14x32xf32>
    %9 = vector.shape_cast %8 : vector<1x14x32xf32> to vector<14x32xf32>
    %10 = tpu.concatenate %1, %3, %5, %7, %9 in 1 : vector<14x32xf32>, vector<14x32xf32>, vector<14x32xf32>, vector<14x32xf32>, vector<14x32xf32> -> vector<14x160xf32>
    %c0_10 = arith.constant 0 : index
    %c1_11 = arith.constant 1 : index
    %c0_12 = arith.constant 0 : index
    %11 = tpu.strided_load %arg1[%c0_10, %c1_11, %c0_12] {strides = array<i32: 1, 2, 1>} : memref<1x32x32xf32, #tpu.memory_space<vmem>>, vector<1x14x32xf32>
    %12 = vector.shape_cast %11 : vector<1x14x32xf32> to vector<14x32xf32>
    %c0_13 = arith.constant 0 : index
    %c2_14 = arith.constant 2 : index
    %c0_15 = arith.constant 0 : index
    %13 = tpu.strided_load %arg1[%c0_13, %c2_14, %c0_15] {strides = array<i32: 1, 2, 1>} : memref<1x32x32xf32, #tpu.memory_space<vmem>>, vector<1x14x32xf32>
    %14 = vector.shape_cast %13 : vector<1x14x32xf32> to vector<14x32xf32>
    %c0_16 = arith.constant 0 : index
    %c3_17 = arith.constant 3 : index
    %c0_18 = arith.constant 0 : index
    %15 = tpu.strided_load %arg1[%c0_16, %c3_17, %c0_18] {strides = array<i32: 1, 2, 1>} : memref<1x32x32xf32, #tpu.memory_space<vmem>>, vector<1x14x32xf32>
    %16 = vector.shape_cast %15 : vector<1x14x32xf32> to vector<14x32xf32>
    %c0_19 = arith.constant 0 : index
    %c4_20 = arith.constant 4 : index
    %c0_21 = arith.constant 0 : index
    %17 = tpu.strided_load %arg1[%c0_19, %c4_20, %c0_21] {strides = array<i32: 1, 2, 1>} : memref<1x32x32xf32, #tpu.memory_space<vmem>>, vector<1x14x32xf32>
    %18 = vector.shape_cast %17 : vector<1x14x32xf32> to vector<14x32xf32>
    %c0_22 = arith.constant 0 : index
    %c5 = arith.constant 5 : index
    %c0_23 = arith.constant 0 : index
    %19 = tpu.strided_load %arg1[%c0_22, %c5, %c0_23] {strides = array<i32: 1, 2, 1>} : memref<1x32x32xf32, #tpu.memory_space<vmem>>, vector<1x14x32xf32>
    %20 = vector.shape_cast %19 : vector<1x14x32xf32> to vector<14x32xf32>
    %21 = tpu.concatenate %12, %14, %16, %18, %20 in 1 : vector<14x32xf32>, vector<14x32xf32>, vector<14x32xf32>, vector<14x32xf32>, vector<14x32xf32> -> vector<14x160xf32>
    %c0_24 = arith.constant 0 : index
    %c0_25 = arith.constant 0 : index
    %22 = vector.load %arg2[%c0_24, %c0_25] : memref<160x256xf32, #tpu.memory_space<vmem>>, vector<160x256xf32>
    %c0_26 = arith.constant 0 : index
    %c0_27 = arith.constant 0 : index
    %23 = vector.load %arg3[%c0_26, %c0_27] : memref<1x256xf32, #tpu.memory_space<vmem>>, vector<1x256xf32>
    %cst = arith.constant dense<0.000000e+00> : vector<14x256xf32>
    %24 = tpu.matmul %10, %22, %cst {dimension_numbers = #tpu.dot_dimension_numbers<[1], [0], [0], [1], [0, 0, 1, 1], [], []>} : vector<14x160xf32>, vector<160x256xf32>, vector<14x256xf32> -> vector<14x256xf32>
    %25 = vector.broadcast %23 : vector<1x256xf32> to vector<14x256xf32>
    %26 = arith.addf %24, %25 : vector<14x256xf32>
    %cst_28 = arith.constant 0.000000e+00 : f32
    %27 = vector.broadcast %cst_28 : f32 to vector<14x256xf32>
    %28 = arith.maximumf %26, %27 : vector<14x256xf32>
    %cst_29 = arith.constant dense<0.000000e+00> : vector<14x256xf32>
    %29 = tpu.matmul %21, %22, %cst_29 {dimension_numbers = #tpu.dot_dimension_numbers<[1], [0], [0], [1], [0, 0, 1, 1], [], []>} : vector<14x160xf32>, vector<160x256xf32>, vector<14x256xf32> -> vector<14x256xf32>
    %30 = vector.broadcast %23 : vector<1x256xf32> to vector<14x256xf32>
    %31 = arith.addf %29, %30 : vector<14x256xf32>
    %cst_30 = arith.constant 0.000000e+00 : f32
    %32 = vector.broadcast %cst_30 : f32 to vector<14x256xf32>
    %33 = arith.maximumf %31, %32 : vector<14x256xf32>
    %34 = vector.extract_strided_slice %28 {offsets = [0, 0], sizes = [14, 84], strides = [1, 1]} : vector<14x256xf32> to vector<14x84xf32>
    %35 = vector.extract_strided_slice %28 {offsets = [0, 128], sizes = [14, 84], strides = [1, 1]} : vector<14x256xf32> to vector<14x84xf32>
    %36 = arith.maximumf %34, %35 : vector<14x84xf32>
    %37 = vector.extract_strided_slice %33 {offsets = [0, 0], sizes = [14, 84], strides = [1, 1]} : vector<14x256xf32> to vector<14x84xf32>
    %38 = vector.extract_strided_slice %33 {offsets = [0, 128], sizes = [14, 84], strides = [1, 1]} : vector<14x256xf32> to vector<14x84xf32>
    %39 = arith.maximumf %37, %38 : vector<14x84xf32>
    %40 = arith.maximumf %36, %39 : vector<14x84xf32>
    %c0_31 = arith.constant 0 : index
    %c0_32 = arith.constant 0 : index
    %41 = vector.load %arg13[%c0_31, %c0_32] : memref<14x84xf32, #tpu.memory_space<vmem>>, vector<14x84xf32>
    tpu.vector_store %arg13[%c0_31, %c0_32], %40 {strides = array<i32>} : memref<14x84xf32, #tpu.memory_space<vmem>>, vector<14x84xf32>,
    %cst_33 = arith.constant 0.000000e+00 : f32
    %42 = vector.broadcast %cst_33 : f32 to vector<5x28xf32>
    %c0_34 = arith.constant 0 : index
    %c0_35 = arith.constant 0 : index
    %43 = tpu.strided_load %arg13[%c0_34, %c0_35] {strides = array<i32: 2, 1>} : memref<14x84xf32, #tpu.memory_space<vmem>>, vector<5x84xf32>
    %c1_36 = arith.constant 1 : index
    %c0_37 = arith.constant 0 : index
    %44 = tpu.strided_load %arg13[%c1_36, %c0_37] {strides = array<i32: 2, 1>} : memref<14x84xf32, #tpu.memory_space<vmem>>, vector<5x84xf32>
    %c2_38 = arith.constant 2 : index
    %c0_39 = arith.constant 0 : index
    %45 = tpu.strided_load %arg13[%c2_38, %c0_39] {strides = array<i32: 2, 1>} : memref<14x84xf32, #tpu.memory_space<vmem>>, vector<5x84xf32>
    %c3_40 = arith.constant 3 : index
    %c0_41 = arith.constant 0 : index
    %46 = tpu.strided_load %arg13[%c3_40, %c0_41] {strides = array<i32: 2, 1>} : memref<14x84xf32, #tpu.memory_space<vmem>>, vector<5x84xf32>
    %c4_42 = arith.constant 4 : index
    %c0_43 = arith.constant 0 : index
    %47 = tpu.strided_load %arg13[%c4_42, %c0_43] {strides = array<i32: 2, 1>} : memref<14x84xf32, #tpu.memory_space<vmem>>, vector<5x84xf32>
    %48 = tpu.concatenate %43, %44, %45, %46, %47, %42 in 1 : vector<5x84xf32>, vector<5x84xf32>, vector<5x84xf32>, vector<5x84xf32>, vector<5x84xf32>, vector<5x28xf32> -> vector<5x448xf32>
    %c1_44 = arith.constant 1 : index
    %c0_45 = arith.constant 0 : index
    %49 = tpu.strided_load %arg13[%c1_44, %c0_45] {strides = array<i32: 2, 1>} : memref<14x84xf32, #tpu.memory_space<vmem>>, vector<5x84xf32>
    %c2_46 = arith.constant 2 : index
    %c0_47 = arith.constant 0 : index
    %50 = tpu.strided_load %arg13[%c2_46, %c0_47] {strides = array<i32: 2, 1>} : memref<14x84xf32, #tpu.memory_space<vmem>>, vector<5x84xf32>
    %c3_48 = arith.constant 3 : index
    %c0_49 = arith.constant 0 : index
    %51 = tpu.strided_load %arg13[%c3_48, %c0_49] {strides = array<i32: 2, 1>} : memref<14x84xf32, #tpu.memory_space<vmem>>, vector<5x84xf32>
    %c4_50 = arith.constant 4 : index
    %c0_51 = arith.constant 0 : index
    %52 = tpu.strided_load %arg13[%c4_50, %c0_51] {strides = array<i32: 2, 1>} : memref<14x84xf32, #tpu.memory_space<vmem>>, vector<5x84xf32>
    %c5_52 = arith.constant 5 : index
    %c0_53 = arith.constant 0 : index
    %53 = tpu.strided_load %arg13[%c5_52, %c0_53] {strides = array<i32: 2, 1>} : memref<14x84xf32, #tpu.memory_space<vmem>>, vector<5x84xf32>
    %54 = tpu.concatenate %49, %50, %51, %52, %53, %42 in 1 : vector<5x84xf32>, vector<5x84xf32>, vector<5x84xf32>, vector<5x84xf32>, vector<5x84xf32>, vector<5x28xf32> -> vector<5x448xf32>
    %c0_54 = arith.constant 0 : index
    %c0_55 = arith.constant 0 : index
    %55 = vector.load %arg4[%c0_54, %c0_55] : memref<448x256xf32, #tpu.memory_space<vmem>>, vector<448x256xf32>
    %c0_56 = arith.constant 0 : index
    %c0_57 = arith.constant 0 : index
    %56 = vector.load %arg5[%c0_56, %c0_57] : memref<1x256xf32, #tpu.memory_space<vmem>>, vector<1x256xf32>
    %cst_58 = arith.constant dense<0.000000e+00> : vector<5x256xf32>
    %57 = tpu.matmul %48, %55, %cst_58 {dimension_numbers = #tpu.dot_dimension_numbers<[1], [0], [0], [1], [0, 0, 1, 1], [], []>} : vector<5x448xf32>, vector<448x256xf32>, vector<5x256xf32> -> vector<5x256xf32>
    %58 = vector.broadcast %56 : vector<1x256xf32> to vector<5x256xf32>
    %59 = arith.addf %57, %58 : vector<5x256xf32>
    %cst_59 = arith.constant 0.000000e+00 : f32
    %60 = vector.broadcast %cst_59 : f32 to vector<5x256xf32>
    %61 = arith.maximumf %59, %60 : vector<5x256xf32>
    %cst_60 = arith.constant dense<0.000000e+00> : vector<5x256xf32>
    %62 = tpu.matmul %54, %55, %cst_60 {dimension_numbers = #tpu.dot_dimension_numbers<[1], [0], [0], [1], [0, 0, 1, 1], [], []>} : vector<5x448xf32>, vector<448x256xf32>, vector<5x256xf32> -> vector<5x256xf32>
    %63 = vector.broadcast %56 : vector<1x256xf32> to vector<5x256xf32>
    %64 = arith.addf %62, %63 : vector<5x256xf32>
    %cst_61 = arith.constant 0.000000e+00 : f32
    %65 = vector.broadcast %cst_61 : f32 to vector<5x256xf32>
    %66 = arith.maximumf %64, %65 : vector<5x256xf32>
    %67 = vector.extract_strided_slice %61 {offsets = [0, 0], sizes = [5, 80], strides = [1, 1]} : vector<5x256xf32> to vector<5x80xf32>
    %68 = vector.extract_strided_slice %61 {offsets = [0, 128], sizes = [5, 80], strides = [1, 1]} : vector<5x256xf32> to vector<5x80xf32>
    %69 = arith.maximumf %67, %68 : vector<5x80xf32>
    %70 = vector.extract_strided_slice %66 {offsets = [0, 0], sizes = [5, 80], strides = [1, 1]} : vector<5x256xf32> to vector<5x80xf32>
    %71 = vector.extract_strided_slice %66 {offsets = [0, 128], sizes = [5, 80], strides = [1, 1]} : vector<5x256xf32> to vector<5x80xf32>
    %72 = arith.maximumf %70, %71 : vector<5x80xf32>
    %73 = arith.maximumf %69, %72 : vector<5x80xf32>
    %cst_62 = arith.constant 0.000000e+00 : f32
    %74 = vector.broadcast %cst_62 : f32 to vector<1x128xf32>
    %75 = vector.extract_strided_slice %73 {offsets = [0, 0], sizes = [1, 80], strides = [1, 1]} : vector<5x80xf32> to vector<1x80xf32>
    %c0_63 = arith.constant 0 : index
    %c0_64 = arith.constant 0 : index
    %c0_65 = arith.constant 0 : index
    %76 = vector.load %arg6[%c0_63, %c0_64, %c0_65] : memref<5x80x128xf32, #tpu.memory_space<vmem>>, vector<1x80x128xf32>
    %77 = vector.shape_cast %76 : vector<1x80x128xf32> to vector<80x128xf32>
    %cst_66 = arith.constant dense<0.000000e+00> : vector<1x128xf32>
    %78 = tpu.matmul %75, %77, %cst_66 {dimension_numbers = #tpu.dot_dimension_numbers<[1], [0], [0], [1], [0, 0, 1, 1], [], []>} : vector<1x80xf32>, vector<80x128xf32>, vector<1x128xf32> -> vector<1x128xf32>
    %79 = arith.addf %74, %78 : vector<1x128xf32>
    %80 = vector.extract_strided_slice %73 {offsets = [1, 0], sizes = [1, 80], strides = [1, 1]} : vector<5x80xf32> to vector<1x80xf32>
    %c1_67 = arith.constant 1 : index
    %c0_68 = arith.constant 0 : index
    %c0_69 = arith.constant 0 : index
    %81 = vector.load %arg6[%c1_67, %c0_68, %c0_69] : memref<5x80x128xf32, #tpu.memory_space<vmem>>, vector<1x80x128xf32>
    %82 = vector.shape_cast %81 : vector<1x80x128xf32> to vector<80x128xf32>
    %cst_70 = arith.constant dense<0.000000e+00> : vector<1x128xf32>
    %83 = tpu.matmul %80, %82, %cst_70 {dimension_numbers = #tpu.dot_dimension_numbers<[1], [0], [0], [1], [0, 0, 1, 1], [], []>} : vector<1x80xf32>, vector<80x128xf32>, vector<1x128xf32> -> vector<1x128xf32>
    %84 = arith.addf %79, %83 : vector<1x128xf32>
    %85 = vector.extract_strided_slice %73 {offsets = [2, 0], sizes = [1, 80], strides = [1, 1]} : vector<5x80xf32> to vector<1x80xf32>
    %c2_71 = arith.constant 2 : index
    %c0_72 = arith.constant 0 : index
    %c0_73 = arith.constant 0 : index
    %86 = vector.load %arg6[%c2_71, %c0_72, %c0_73] : memref<5x80x128xf32, #tpu.memory_space<vmem>>, vector<1x80x128xf32>
    %87 = vector.shape_cast %86 : vector<1x80x128xf32> to vector<80x128xf32>
    %cst_74 = arith.constant dense<0.000000e+00> : vector<1x128xf32>
    %88 = tpu.matmul %85, %87, %cst_74 {dimension_numbers = #tpu.dot_dimension_numbers<[1], [0], [0], [1], [0, 0, 1, 1], [], []>} : vector<1x80xf32>, vector<80x128xf32>, vector<1x128xf32> -> vector<1x128xf32>
    %89 = arith.addf %84, %88 : vector<1x128xf32>
    %90 = vector.extract_strided_slice %73 {offsets = [3, 0], sizes = [1, 80], strides = [1, 1]} : vector<5x80xf32> to vector<1x80xf32>
    %c3_75 = arith.constant 3 : index
    %c0_76 = arith.constant 0 : index
    %c0_77 = arith.constant 0 : index
    %91 = vector.load %arg6[%c3_75, %c0_76, %c0_77] : memref<5x80x128xf32, #tpu.memory_space<vmem>>, vector<1x80x128xf32>
    %92 = vector.shape_cast %91 : vector<1x80x128xf32> to vector<80x128xf32>
    %cst_78 = arith.constant dense<0.000000e+00> : vector<1x128xf32>
    %93 = tpu.matmul %90, %92, %cst_78 {dimension_numbers = #tpu.dot_dimension_numbers<[1], [0], [0], [1], [0, 0, 1, 1], [], []>} : vector<1x80xf32>, vector<80x128xf32>, vector<1x128xf32> -> vector<1x128xf32>
    %94 = arith.addf %89, %93 : vector<1x128xf32>
    %95 = vector.extract_strided_slice %73 {offsets = [4, 0], sizes = [1, 80], strides = [1, 1]} : vector<5x80xf32> to vector<1x80xf32>
    %c4_79 = arith.constant 4 : index
    %c0_80 = arith.constant 0 : index
    %c0_81 = arith.constant 0 : index
    %96 = vector.load %arg6[%c4_79, %c0_80, %c0_81] : memref<5x80x128xf32, #tpu.memory_space<vmem>>, vector<1x80x128xf32>
    %97 = vector.shape_cast %96 : vector<1x80x128xf32> to vector<80x128xf32>
    %cst_82 = arith.constant dense<0.000000e+00> : vector<1x128xf32>
    %98 = tpu.matmul %95, %97, %cst_82 {dimension_numbers = #tpu.dot_dimension_numbers<[1], [0], [0], [1], [0, 0, 1, 1], [], []>} : vector<1x80xf32>, vector<80x128xf32>, vector<1x128xf32> -> vector<1x128xf32>
    %99 = arith.addf %94, %98 : vector<1x128xf32>
    %c0_83 = arith.constant 0 : index
    %c0_84 = arith.constant 0 : index
    %100 = vector.load %arg7[%c0_83, %c0_84] : memref<1x128xf32, #tpu.memory_space<vmem>>, vector<1x128xf32>
    %101 = arith.addf %99, %100 : vector<1x128xf32>
    %cst_85 = arith.constant 0.000000e+00 : f32
    %102 = vector.broadcast %cst_85 : f32 to vector<1x128xf32>
    %103 = arith.maximumf %101, %102 : vector<1x128xf32>
    %c0_86 = arith.constant 0 : index
    %c0_87 = arith.constant 0 : index
    %104 = vector.load %arg8[%c0_86, %c0_87] : memref<128x128xf32, #tpu.memory_space<vmem>>, vector<128x128xf32>
    %cst_88 = arith.constant dense<0.000000e+00> : vector<1x128xf32>
    %105 = tpu.matmul %103, %104, %cst_88 {dimension_numbers = #tpu.dot_dimension_numbers<[1], [0], [0], [1], [0, 0, 1, 1], [], []>} : vector<1x128xf32>, vector<128x128xf32>, vector<1x128xf32> -> vector<1x128xf32>
    %c0_89 = arith.constant 0 : index
    %c0_90 = arith.constant 0 : index
    %106 = vector.load %arg9[%c0_89, %c0_90] : memref<1x128xf32, #tpu.memory_space<vmem>>, vector<1x128xf32>
    %107 = arith.addf %105, %106 : vector<1x128xf32>
    %cst_91 = arith.constant 0.000000e+00 : f32
    %108 = vector.broadcast %cst_91 : f32 to vector<1x128xf32>
    %109 = arith.maximumf %107, %108 : vector<1x128xf32>
    %c0_92 = arith.constant 0 : index
    %c0_93 = arith.constant 0 : index
    %110 = vector.load %arg10[%c0_92, %c0_93] : memref<128x128xf32, #tpu.memory_space<vmem>>, vector<128x128xf32>
    %cst_94 = arith.constant dense<0.000000e+00> : vector<1x128xf32>
    %111 = tpu.matmul %109, %110, %cst_94 {dimension_numbers = #tpu.dot_dimension_numbers<[1], [0], [0], [1], [0, 0, 1, 1], [], []>} : vector<1x128xf32>, vector<128x128xf32>, vector<1x128xf32> -> vector<1x128xf32>
    %c0_95 = arith.constant 0 : index
    %c0_96 = arith.constant 0 : index
    %112 = vector.load %arg11[%c0_95, %c0_96] : memref<1x128xf32, #tpu.memory_space<vmem>>, vector<1x128xf32>
    %113 = arith.addf %111, %112 : vector<1x128xf32>
    %cst_97 = arith.constant 0.000000e+00 : f32
    %114 = vector.broadcast %cst_97 : f32 to vector<1x128xf32>
    %115 = arith.maximumf %113, %114 : vector<1x128xf32>
    %c0_98 = arith.constant 0 : index
    %c0_99 = arith.constant 0 : index
    %c0_100 = arith.constant 0 : index
    %116 = vector.load %arg12[%c0_98, %c0_99, %c0_100] : memref<1x1x128xf32, #tpu.memory_space<vmem>>, vector<1x1x128xf32>
    %117 = vector.shape_cast %116 : vector<1x1x128xf32> to vector<1x128xf32>
    %118 = vector.shape_cast %115 : vector<1x128xf32> to vector<1x1x128xf32>
    tpu.vector_store %arg12[%c0_98, %c0_99, %c0_100], %118 {strides = array<i32>} : memref<1x1x128xf32, #tpu.memory_space<vmem>>, vector<1x1x128xf32>,
    return
  }
  func.func @transform_0(%arg0: i32) -> (i32, i32, i32) {
    %c0_i32 = arith.constant 0 : i32
    %c0_i32_0 = arith.constant 0 : i32
    %c0_i32_1 = arith.constant 0 : i32
    return %arg0, %c0_i32, %c0_i32_0 : i32, i32, i32
  }
  func.func @transform_1(%arg0: i32) -> (i32, i32) {
    %c0_i32 = arith.constant 0 : i32
    %c0_i32_0 = arith.constant 0 : i32
    %c0_i32_1 = arith.constant 0 : i32
    return %c0_i32, %c0_i32_0 : i32, i32
  }
  func.func @transform_2(%arg0: i32) -> (i32, i32) {
    %c0_i32 = arith.constant 0 : i32
    %c0_i32_0 = arith.constant 0 : i32
    %c0_i32_1 = arith.constant 0 : i32
    return %c0_i32, %c0_i32_0 : i32, i32
  }
  func.func @transform_3(%arg0: i32) -> (i32, i32) {
    %c0_i32 = arith.constant 0 : i32
    %c0_i32_0 = arith.constant 0 : i32
    %c0_i32_1 = arith.constant 0 : i32
    return %c0_i32, %c0_i32_0 : i32, i32
  }
  func.func @transform_4(%arg0: i32) -> (i32, i32) {
    %c0_i32 = arith.constant 0 : i32
    %c0_i32_0 = arith.constant 0 : i32
    %c0_i32_1 = arith.constant 0 : i32
    return %c0_i32, %c0_i32_0 : i32, i32
  }
  func.func @transform_5(%arg0: i32) -> (i32, i32, i32) {
    %c0_i32 = arith.constant 0 : i32
    %c0_i32_0 = arith.constant 0 : i32
    %c0_i32_1 = arith.constant 0 : i32
    %c0_i32_2 = arith.constant 0 : i32
    return %c0_i32, %c0_i32_0, %c0_i32_1 : i32, i32, i32
  }
  func.func @transform_6(%arg0: i32) -> (i32, i32) {
    %c0_i32 = arith.constant 0 : i32
    %c0_i32_0 = arith.constant 0 : i32
    %c0_i32_1 = arith.constant 0 : i32
    return %c0_i32, %c0_i32_0 : i32, i32
  }
  func.func @transform_7(%arg0: i32) -> (i32, i32) {
    %c0_i32 = arith.constant 0 : i32
    %c0_i32_0 = arith.constant 0 : i32
    %c0_i32_1 = arith.constant 0 : i32
    return %c0_i32, %c0_i32_0 : i32, i32
  }
  func.func @transform_8(%arg0: i32) -> (i32, i32) {
    %c0_i32 = arith.constant 0 : i32
    %c0_i32_0 = arith.constant 0 : i32
    %c0_i32_1 = arith.constant 0 : i32
    return %c0_i32, %c0_i32_0 : i32, i32
  }
  func.func @transform_9(%arg0: i32) -> (i32, i32) {
    %c0_i32 = arith.constant 0 : i32
    %c0_i32_0 = arith.constant 0 : i32
    %c0_i32_1 = arith.constant 0 : i32
    return %c0_i32, %c0_i32_0 : i32, i32
  }
  func.func @transform_10(%arg0: i32) -> (i32, i32) {
    %c0_i32 = arith.constant 0 : i32
    %c0_i32_0 = arith.constant 0 : i32
    %c0_i32_1 = arith.constant 0 : i32
    return %c0_i32, %c0_i32_0 : i32, i32
  }
  func.func @transform_11(%arg0: i32) -> (i32, i32, i32) {
    %c0_i32 = arith.constant 0 : i32
    %c0_i32_0 = arith.constant 0 : i32
    %c0_i32_1 = arith.constant 0 : i32
    return %arg0, %c0_i32, %c0_i32_0 : i32, i32, i32
  }
}

</mosaic_0001>

<llo_original>
// kernel: net_forward.1
$region0: #{net_forward.1}
  #allocation0 [shape = 'u32[]', space=smem, size = 0x4, offset = 0x4, fixed_abs, tag = 'smem constant byte address 0x4 - core index']
  #allocation1 [shape = 'u32[144,128]{1,0:T(1,128)}', space=vmem, size = 0x12000, scoped, tag = 'internal scratch']
  #allocation2 [shape = 'f32[14,84]{1,0:T(8,128)}', space=vmem, size = 0x2000, scoped, tag = 'scratch operand']
  %s0 = inlined_call_operand.hbm [shape: f32[2,32,32], index: 0, kind: input, shape index: {}]
  %s1 = inlined_call_operand.hbm [shape: f32[160,256], index: 1, kind: input, shape index: {}]
  %s2 = inlined_call_operand.vmem [shape: f32[1,256], index: 2, kind: input, shape index: {}]
  %s3 = inlined_call_operand.hbm [shape: f32[448,256], index: 3, kind: input, shape index: {}]
  %s4 = inlined_call_operand.vmem [shape: f32[1,256], index: 4, kind: input, shape index: {}]
  %s5 = inlined_call_operand.hbm [shape: f32[5,80,128], index: 5, kind: input, shape index: {}]
  %s6 = inlined_call_operand.vmem [shape: f32[1,128], index: 6, kind: input, shape index: {}]
  %s7 = inlined_call_operand.hbm [shape: f32[128,128], index: 7, kind: input, shape index: {}]
  %s8 = inlined_call_operand.vmem [shape: f32[1,128], index: 8, kind: input, shape index: {}]
  %s9 = inlined_call_operand.hbm [shape: f32[128,128], index: 9, kind: input, shape index: {}]
  %s10 = inlined_call_operand.vmem [shape: f32[1,128], index: 10, kind: input, shape index: {}]
  %s11 = inlined_call_operand.hbm [shape: f32[2,1,128], index: 11, kind: output, shape index: {}]
  %s12 = sld [smem:[#allocation0]]
  $region101: #{net_forward.1} parent=0
    _
  %s14 = ssub.s32 1, %s12
  %s15 = scalar_select 0, %s14, %s12
  $region1: #{net_forward.1} parent=0
    #allocation3 [shape = 'u8[32768]{0}', space=vmem, size = 0x8000, scoped, tag = 'input window, operand 0']
    #allocation4 [shape = 's32[2]{0}', space=sflag, size = 0x8, scoped, tag = 'scoped memory for net_forward.1']
    #allocation5 [shape = 's32[2]{0}', space=sflag, size = 0x8, scoped, tag = 'scoped memory for net_forward.1']
    #allocation6 [shape = 'u8[163840]{0}', space=vmem, size = 0x28000, scoped, tag = 'input window, operand 1, single buffered']
    #allocation7 [shape = 's32[1]{0}', space=sflag, size = 0x4, scoped, tag = 'scoped memory for net_forward.1']
    #allocation8 [shape = 'u8[458752]{0}', space=vmem, size = 0x70000, scoped, tag = 'input window, operand 3, single buffered']
    #allocation9 [shape = 'u8[204800]{0}', space=vmem, size = 0x32000, scoped, tag = 'input window, operand 5, single buffered']
    #allocation10 [shape = 's32[1]{0}', space=sflag, size = 0x4, scoped, tag = 'scoped memory for net_forward.1']
    #allocation11 [shape = 'u8[65536]{0}', space=vmem, size = 0x10000, scoped, tag = 'input window, operand 7, single buffered']
    #allocation12 [shape = 'u8[65536]{0}', space=vmem, size = 0x10000, scoped, tag = 'input window, operand 9, single buffered']
    #allocation13 [shape = 's32[1]{0}', space=sflag, size = 0x4, scoped, tag = 'scoped memory for net_forward.1']
    #allocation14 [shape = 'u8[1024]{0}', space=vmem, size = 0x400, scoped, tag = 'output window, operand 0']
    %16 = vsyncpa [#allocation4], 0
    %s17 = scalar_lea.sflag [#allocation4], 1
    %18 = vsyncpa %s17, 0
    %19 = vsyncpa [#allocation7], 0
    %20 = vsyncpa [#allocation10], 0
    %21 = vsyncpa [#allocation13], 0
    %22 = vsyncpa [#allocation5], 0
    %s23 = scalar_lea.sflag [#allocation5], 1
    %24 = vsyncpa %s23, 0
    loop: start=0, step=1, limit=4
    $region2: #{net_forward.1} parent=1 // loop_pre_header
      _
    $region3: #{net_forward.1} parent=1 // loop_header
      %s26 = sphi 0, %s30
      %p27 = scmp.ge.s32.totalorder %s26, 4
      %s36 = sphi 0, %s38
      %s39 = sphi 0, %s36
      %s40 = sphi 0, %s39
      %s56 = sphi 0, %s40
      %s60 = sphi 0, %s60
      %s62 = sphi 0, %s60
      %s63 = sphi 0, %s62
      %s77 = sphi 0, %s63
      %s81 = sphi 0, %s81
      %s83 = sphi 0, %s81
      %s84 = sphi 0, %s83
      %s98 = sphi 0, %s84
      %s102 = sphi 0, %s102
      %s104 = sphi 0, %s102
      %s105 = sphi 0, %s104
      %s119 = sphi 0, %s105
      %s123 = sphi 0, %s123
      %s125 = sphi 0, %s123
      %s126 = sphi 0, %s125
      %s140 = sphi 0, %s126
      %s144 = sphi 0, %s144
      %s146 = sphi 0, %s144
      %s147 = sphi 0, %s146
      %s161 = sphi 0, %s147
      %s165 = sphi 0, %s165
      %s167 = sphi 0, %s165
      %s168 = sphi 0, %s167
      %s182 = sphi 0, %s168
      %s186 = sphi 0, %s186
      %s188 = sphi 0, %s186
      %s189 = sphi 0, %s188
      %s203 = sphi 0, %s189
      %s207 = sphi 0, %s207
      %s209 = sphi 0, %s207
      %s210 = sphi 0, %s209
      %s224 = sphi 0, %s210
      %s228 = sphi 0, %s228
      %s230 = sphi 0, %s228
      %s231 = sphi 0, %s230
      %s245 = sphi 0, %s231
      %s249 = sphi 0, %s249
      %s251 = sphi 0, %s249
      %s252 = sphi 0, %s251
      %s266 = sphi 0, %s252
      %s272 = sphi 0, %s274
      %s275 = sphi 0, %s272
      %s276 = sphi 0, %s275
      %s292 = sphi 0, %s276
    $region4: #{net_forward.1} parent=1 // loop_header_branch
      %29 = sbr.rel (%p27) target = $region8
    $region5: #{net_forward.1} parent=1 // loop_body
      %s31 = ssub.s32 %s26, 1
      %s32 = ssub.s32 %s26, 2
      %s33 = sadd.s32 %s26, 1
      %s34 = ssub.s32 %s26, %s33
      %p35 = scmp.eq.s32.totalorder %s34, 0
      %s37 = sadd.s32 %s36, 1
      %s38 = scalar_select %p35, %s36, %s37
      %p41 = pneg %p35
      %p42 = scmp.eq.s32.totalorder %s26, 1
      %p43 = por %p41, %p42
      %p44 = scmp.ne.s32.totalorder %s36, %s39
      %p45 = scmp.eq.s32.totalorder %s26, 0
      %p46 = por %p44, %p45
      %p47 = scmp.ne.s32.totalorder %s36, %s39
      %p48 = scmp.eq.s32.totalorder %s31, 1
      %p49 = por %p47, %p48
      %p50 = scmp.ne.s32.totalorder %s39, %s40
      %p51 = scmp.eq.s32.totalorder %s31, 0
      %p52 = por %p50, %p51
      %p53 = scmp.ne.s32.totalorder %s39, %s40
      %p54 = scmp.eq.s32.totalorder %s32, 1
      %p55 = por %p53, %p54
      %p57 = scmp.ne.s32.totalorder %s40, %s56
      %p58 = scmp.eq.s32.totalorder %s32, 0
      %p59 = por %p57, %p58
      %s61 = sadd.s32 %s60, 1
      %p64 = scmp.eq.s32.totalorder %s26, 1
      %p65 = scmp.ne.s32.totalorder %s60, %s62
      %p66 = scmp.eq.s32.totalorder %s26, 0
      %p67 = por %p65, %p66
      %p68 = scmp.ne.s32.totalorder %s60, %s62
      %p69 = scmp.eq.s32.totalorder %s31, 1
      %p70 = por %p68, %p69
      %p71 = scmp.ne.s32.totalorder %s62, %s63
      %p72 = scmp.eq.s32.totalorder %s31, 0
      %p73 = por %p71, %p72
      %p74 = scmp.ne.s32.totalorder %s62, %s63
      %p75 = scmp.eq.s32.totalorder %s32, 1
      %p76 = por %p74, %p75
      %p78 = scmp.ne.s32.totalorder %s63, %s77
      %p79 = scmp.eq.s32.totalorder %s32, 0
      %p80 = por %p78, %p79
      %s82 = sadd.s32 %s81, 1
      %p85 = scmp.eq.s32.totalorder %s26, 1
      %p86 = scmp.ne.s32.totalorder %s81, %s83
      %p87 = scmp.eq.s32.totalorder %s26, 0
      %p88 = por %p86, %p87
      %p89 = scmp.ne.s32.totalorder %s81, %s83
      %p90 = scmp.eq.s32.totalorder %s31, 1
      %p91 = por %p89, %p90
      %p92 = scmp.ne.s32.totalorder %s83, %s84
      %p93 = scmp.eq.s32.totalorder %s31, 0
      %p94 = por %p92, %p93
      %p95 = scmp.ne.s32.totalorder %s83, %s84
      %p96 = scmp.eq.s32.totalorder %s32, 1
      %p97 = por %p95, %p96
      %p99 = scmp.ne.s32.totalorder %s84, %s98
      %p100 = scmp.eq.s32.totalorder %s32, 0
      %p101 = por %p99, %p100
      %s103 = sadd.s32 %s102, 1
      %p106 = scmp.eq.s32.totalorder %s26, 1
      %p107 = scmp.ne.s32.totalorder %s102, %s104
      %p108 = scmp.eq.s32.totalorder %s26, 0
      %p109 = por %p107, %p108
      %p110 = scmp.ne.s32.totalorder %s102, %s104
      %p111 = scmp.eq.s32.totalorder %s31, 1
      %p112 = por %p110, %p111
      %p113 = scmp.ne.s32.totalorder %s104, %s105
      %p114 = scmp.eq.s32.totalorder %s31, 0
      %p115 = por %p113, %p114
      %p116 = scmp.ne.s32.totalorder %s104, %s105
      %p117 = scmp.eq.s32.totalorder %s32, 1
      %p118 = por %p116, %p117
      %p120 = scmp.ne.s32.totalorder %s105, %s119
      %p121 = scmp.eq.s32.totalorder %s32, 0
      %p122 = por %p120, %p121
      %s124 = sadd.s32 %s123, 1
      %p127 = scmp.eq.s32.totalorder %s26, 1
      %p128 = scmp.ne.s32.totalorder %s123, %s125
      %p129 = scmp.eq.s32.totalorder %s26, 0
      %p130 = por %p128, %p129
      %p131 = scmp.ne.s32.totalorder %s123, %s125
      %p132 = scmp.eq.s32.totalorder %s31, 1
      %p133 = por %p131, %p132
      %p134 = scmp.ne.s32.totalorder %s125, %s126
      %p135 = scmp.eq.s32.totalorder %s31, 0
      %p136 = por %p134, %p135
      %p137 = scmp.ne.s32.totalorder %s125, %s126
      %p138 = scmp.eq.s32.totalorder %s32, 1
      %p139 = por %p137, %p138
      %p141 = scmp.ne.s32.totalorder %s126, %s140
      %p142 = scmp.eq.s32.totalorder %s32, 0
      %p143 = por %p141, %p142
      %s145 = sadd.s32 %s144, 1
      %p148 = scmp.eq.s32.totalorder %s26, 1
      %p149 = scmp.ne.s32.totalorder %s144, %s146
      %p150 = scmp.eq.s32.totalorder %s26, 0
      %p151 = por %p149, %p150
      %p152 = scmp.ne.s32.totalorder %s144, %s146
      %p153 = scmp.eq.s32.totalorder %s31, 1
      %p154 = por %p152, %p153
      %p155 = scmp.ne.s32.totalorder %s146, %s147
      %p156 = scmp.eq.s32.totalorder %s31, 0
      %p157 = por %p155, %p156
      %p158 = scmp.ne.s32.totalorder %s146, %s147
      %p159 = scmp.eq.s32.totalorder %s32, 1
      %p160 = por %p158, %p159
      %p162 = scmp.ne.s32.totalorder %s147, %s161
      %p163 = scmp.eq.s32.totalorder %s32, 0
      %p164 = por %p162, %p163
      %s166 = sadd.s32 %s165, 1
      %p169 = scmp.eq.s32.totalorder %s26, 1
      %p170 = scmp.ne.s32.totalorder %s165, %s167
      %p171 = scmp.eq.s32.totalorder %s26, 0
      %p172 = por %p170, %p171
      %p173 = scmp.ne.s32.totalorder %s165, %s167
      %p174 = scmp.eq.s32.totalorder %s31, 1
      %p175 = por %p173, %p174
      %p176 = scmp.ne.s32.totalorder %s167, %s168
      %p177 = scmp.eq.s32.totalorder %s31, 0
      %p178 = por %p176, %p177
      %p179 = scmp.ne.s32.totalorder %s167, %s168
      %p180 = scmp.eq.s32.totalorder %s32, 1
      %p181 = por %p179, %p180
      %p183 = scmp.ne.s32.totalorder %s168, %s182
      %p184 = scmp.eq.s32.totalorder %s32, 0
      %p185 = por %p183, %p184
      %s187 = sadd.s32 %s186, 1
      %p190 = scmp.eq.s32.totalorder %s26, 1
      %p191 = scmp.ne.s32.totalorder %s186, %s188
      %p192 = scmp.eq.s32.totalorder %s26, 0
      %p193 = por %p191, %p192
      %p194 = scmp.ne.s32.totalorder %s186, %s188
      %p195 = scmp.eq.s32.totalorder %s31, 1
      %p196 = por %p194, %p195
      %p197 = scmp.ne.s32.totalorder %s188, %s189
      %p198 = scmp.eq.s32.totalorder %s31, 0
      %p199 = por %p197, %p198
      %p200 = scmp.ne.s32.totalorder %s188, %s189
      %p201 = scmp.eq.s32.totalorder %s32, 1
      %p202 = por %p200, %p201
      %p204 = scmp.ne.s32.totalorder %s189, %s203
      %p205 = scmp.eq.s32.totalorder %s32, 0
      %p206 = por %p204, %p205
      %s208 = sadd.s32 %s207, 1
      %p211 = scmp.eq.s32.totalorder %s26, 1
      %p212 = scmp.ne.s32.totalorder %s207, %s209
      %p213 = scmp.eq.s32.totalorder %s26, 0
      %p214 = por %p212, %p213
      %p215 = scmp.ne.s32.totalorder %s207, %s209
      %p216 = scmp.eq.s32.totalorder %s31, 1
      %p217 = por %p215, %p216
      %p218 = scmp.ne.s32.totalorder %s209, %s210
      %p219 = scmp.eq.s32.totalorder %s31, 0
      %p220 = por %p218, %p219
      %p221 = scmp.ne.s32.totalorder %s209, %s210
      %p222 = scmp.eq.s32.totalorder %s32, 1
      %p223 = por %p221, %p222
      %p225 = scmp.ne.s32.totalorder %s210, %s224
      %p226 = scmp.eq.s32.totalorder %s32, 0
      %p227 = por %p225, %p226
      %s229 = sadd.s32 %s228, 1
      %p232 = scmp.eq.s32.totalorder %s26, 1
      %p233 = scmp.ne.s32.totalorder %s228, %s230
      %p234 = scmp.eq.s32.totalorder %s26, 0
      %p235 = por %p233, %p234
      %p236 = scmp.ne.s32.totalorder %s228, %s230
      %p237 = scmp.eq.s32.totalorder %s31, 1
      %p238 = por %p236, %p237
      %p239 = scmp.ne.s32.totalorder %s230, %s231
      %p240 = scmp.eq.s32.totalorder %s31, 0
      %p241 = por %p239, %p240
      %p242 = scmp.ne.s32.totalorder %s230, %s231
      %p243 = scmp.eq.s32.totalorder %s32, 1
      %p244 = por %p242, %p243
      %p246 = scmp.ne.s32.totalorder %s231, %s245
      %p247 = scmp.eq.s32.totalorder %s32, 0
      %p248 = por %p246, %p247
      %s250 = sadd.s32 %s249, 1
      %p253 = scmp.eq.s32.totalorder %s26, 1
      %p254 = scmp.ne.s32.totalorder %s249, %s251
      %p255 = scmp.eq.s32.totalorder %s26, 0
      %p256 = por %p254, %p255
      %p257 = scmp.ne.s32.totalorder %s249, %s251
      %p258 = scmp.eq.s32.totalorder %s31, 1
      %p259 = por %p257, %p258
      %p260 = scmp.ne.s32.totalorder %s251, %s252
      %p261 = scmp.eq.s32.totalorder %s31, 0
      %p262 = por %p260, %p261
      %p263 = scmp.ne.s32.totalorder %s251, %s252
      %p264 = scmp.eq.s32.totalorder %s32, 1
      %p265 = por %p263, %p264
      %p267 = scmp.ne.s32.totalorder %s252, %s266
      %p268 = scmp.eq.s32.totalorder %s32, 0
      %p269 = por %p267, %p268
      %s270 = ssub.s32 %s26, %s33
      %p271 = scmp.eq.s32.totalorder %s270, 0
      %s273 = sadd.s32 %s272, 1
      %s274 = scalar_select %p271, %s272, %s273
      %p277 = pneg %p271
      %p278 = scmp.eq.s32.totalorder %s26, 1
      %p279 = por %p277, %p278
      %p280 = scmp.ne.s32.totalorder %s272, %s275
      %p281 = scmp.eq.s32.totalorder %s26, 0
      %p282 = por %p280, %p281
      %p283 = scmp.ne.s32.totalorder %s272, %s275
      %p284 = scmp.eq.s32.totalorder %s31, 1
      %p285 = por %p283, %p284
      %p286 = scmp.ne.s32.totalorder %s275, %s276
      %p287 = scmp.eq.s32.totalorder %s31, 0
      %p288 = por %p286, %p287
      %p289 = scmp.ne.s32.totalorder %s275, %s276
      %p290 = scmp.eq.s32.totalorder %s32, 1
      %p291 = por %p289, %p290
      %p293 = scmp.ne.s32.totalorder %s276, %s292
      %p294 = scmp.eq.s32.totalorder %s32, 0
      %p295 = por %p293, %p294
      %p296 = scmp.le.s32.totalorder 1, %s26
      %p297 = scmp.lt.s32.totalorder %s26, 3
      %p298 = pnand %p296, %p297
      %p299 = pneg %p298
      // Predicated region
      $region9: #{net_forward.1} parent=5 // pred_check
        _
      $region10: #{net_forward.1} parent=5 // pred_check_branch
        %301 = sbr.rel (%p298) target = $region12
      $region11: #{net_forward.1} parent=5 // pred_region
        %s302 = ssub.s32 %s26, 1
        // Predicated region
        $region13: #{net_forward.1} parent=11 // pred_check
          %p303 = pneg %p73
        $region14: #{net_forward.1} parent=11 // pred_check_branch
          %305 = sbr.rel (%p303) target = $region16
        $region15: #{net_forward.1} parent=11 // pred_region
          %s307 = ssub.s32 5120, 5120
          %308 = vsyncadd [#allocation7], %s307
          %s309 = sshll.u32 [#allocation6], 4
          %s310 = int_to_ptr.vmem [resolvable:$true] %s309
          %315 = dma.hbm_to_vmem [thread:$0]  %s1, 5120, %s310, [#allocation7], 256, 256, 16
        $region16: #{net_forward.1} parent=11 // pred_fallthru
          _
        // Predicated region
        $region17: #{net_forward.1} parent=11 // pred_check
          %p316 = pneg %p94
        $region18: #{net_forward.1} parent=11 // pred_check_branch
          %318 = sbr.rel (%p316) target = $region20
        $region19: #{net_forward.1} parent=11 // pred_region
          _
        $region20: #{net_forward.1} parent=11 // pred_fallthru
          _
        // Predicated region
        $region21: #{net_forward.1} parent=11 // pred_check
          %p319 = pneg %p115
        $region22: #{net_forward.1} parent=11 // pred_check_branch
          %321 = sbr.rel (%p319) target = $region24
        $region23: #{net_forward.1} parent=11 // pred_region
          %s323 = ssub.s32 14336, 14336
          %324 = vsyncadd [#allocation7], %s323
          %s325 = sshll.u32 [#allocation8], 4
          %s326 = int_to_ptr.vmem [resolvable:$true] %s325
          %331 = dma.hbm_to_vmem [thread:$0]  %s3, 14336, %s326, [#allocation7], 256, 256, 16
        $region24: #{net_forward.1} parent=11 // pred_fallthru
          _
        // Predicated region
        $region25: #{net_forward.1} parent=11 // pred_check
          %p332 = pneg %p136
        $region26: #{net_forward.1} parent=11 // pred_check_branch
          %334 = sbr.rel (%p332) target = $region28
        $region27: #{net_forward.1} parent=11 // pred_region
          _
        $region28: #{net_forward.1} parent=11 // pred_fallthru
          _
        // Predicated region
        $region29: #{net_forward.1} parent=11 // pred_check
          %p335 = pneg %p157
        $region30: #{net_forward.1} parent=11 // pred_check_branch
          %337 = sbr.rel (%p335) target = $region32
        $region31: #{net_forward.1} parent=11 // pred_region
          %s339 = ssub.s32 6400, 6400
          %340 = vsyncadd [#allocation10], %s339
          %s341 = sshll.u32 [#allocation9], 4
          %s342 = int_to_ptr.vmem [resolvable:$true] %s341
          %347 = dma.hbm_to_vmem [thread:$0]  %s5, 6400, %s342, [#allocation10], 128, 128, 8
        $region32: #{net_forward.1} parent=11 // pred_fallthru
          _
        // Predicated region
        $region33: #{net_forward.1} parent=11 // pred_check
          %p348 = pneg %p178
        $region34: #{net_forward.1} parent=11 // pred_check_branch
          %350 = sbr.rel (%p348) target = $region36
        $region35: #{net_forward.1} parent=11 // pred_region
          _
        $region36: #{net_forward.1} parent=11 // pred_fallthru
          _
        // Predicated region
        $region37: #{net_forward.1} parent=11 // pred_check
          %p351 = pneg %p199
        $region38: #{net_forward.1} parent=11 // pred_check_branch
          %353 = sbr.rel (%p351) target = $region40
        $region39: #{net_forward.1} parent=11 // pred_region
          %s355 = ssub.s32 2048, 2048
          %356 = vsyncadd [#allocation10], %s355
          %s357 = sshll.u32 [#allocation11], 4
          %s358 = int_to_ptr.vmem [resolvable:$true] %s357
          %363 = dma.hbm_to_vmem [thread:$0]  %s7, 2048, %s358, [#allocation10], 128, 128, 8
        $region40: #{net_forward.1} parent=11 // pred_fallthru
          _
        // Predicated region
        $region41: #{net_forward.1} parent=11 // pred_check
          %p364 = pneg %p220
        $region42: #{net_forward.1} parent=11 // pred_check_branch
          %366 = sbr.rel (%p364) target = $region44
        $region43: #{net_forward.1} parent=11 // pred_region
          _
        $region44: #{net_forward.1} parent=11 // pred_fallthru
          _
        // Predicated region
        $region45: #{net_forward.1} parent=11 // pred_check
          %p367 = pneg %p241
        $region46: #{net_forward.1} parent=11 // pred_check_branch
          %369 = sbr.rel (%p367) target = $region48
        $region47: #{net_forward.1} parent=11 // pred_region
          %s371 = ssub.s32 2048, 2048
          %372 = vsyncadd [#allocation13], %s371
          %s373 = sshll.u32 [#allocation12], 4
          %s374 = int_to_ptr.vmem [resolvable:$true] %s373
          %379 = dma.hbm_to_vmem [thread:$0]  %s9, 2048, %s374, [#allocation13], 128, 128, 8
        $region48: #{net_forward.1} parent=11 // pred_fallthru
          _
        // Predicated region
        $region49: #{net_forward.1} parent=11 // pred_check
          %p380 = pneg %p262
        $region50: #{net_forward.1} parent=11 // pred_check_branch
          %382 = sbr.rel (%p380) target = $region52
        $region51: #{net_forward.1} parent=11 // pred_region
          _
        $region52: #{net_forward.1} parent=11 // pred_fallthru
          _
      $region12: #{net_forward.1} parent=5 // pred_fallthru
        _
      %p383 = scmp.lt.s32.totalorder %s26, 2
      // Predicated region
      $region53: #{net_forward.1} parent=5 // pred_check
        %p384 = pneg %p383
      $region54: #{net_forward.1} parent=5 // pred_check_branch
        %386 = sbr.rel (%p384) target = $region56
      $region55: #{net_forward.1} parent=5 // pred_region
        // Predicated region
        $region57: #{net_forward.1} parent=55 // pred_check
          %p387 = pneg %p46
        $region58: #{net_forward.1} parent=55 // pred_check_branch
          %389 = sbr.rel (%p387) target = $region60
        $region59: #{net_forward.1} parent=55 // pred_region
          %s390 = sand.u32 %s36, 1
          %s391 = scalar_lea.sflag [#allocation4], %s390
          %s392 = sand.u32 %s36, 1
          %s393 = smul.addr %s392, 32
          %s394 = scalar_lea.vmem [#allocation3], %s393
          %s396 = ssub.s32 512, 512
          %397 = vsyncadd %s391, %s396
          %s398 = smul.addr %s26, 4
          %s399 = smul.addr %s398, 128
          %s400 = scalar_lea.hbm %s0, %s399
          %s401 = sshll.u32 %s394, 4
          %s402 = int_to_ptr.vmem [resolvable:$true] %s401
          %407 = dma.hbm_to_vmem [thread:$0]  %s400, 512, %s402, %s391, 128, 128, 8
        $region60: #{net_forward.1} parent=55 // pred_fallthru
          _
      $region56: #{net_forward.1} parent=5 // pred_fallthru
        _
      %p408 = scmp.le.s32.totalorder 1, %s26
      %p409 = scmp.lt.s32.totalorder %s26, 3
      %p410 = pnand %p408, %p409
      %p411 = pneg %p410
      // Predicated region
      $region61: #{net_forward.1} parent=5 // pred_check
        _
      $region62: #{net_forward.1} parent=5 // pred_check_branch
        %413 = sbr.rel (%p410) target = $region64
      $region63: #{net_forward.1} parent=5 // pred_region
        %s414 = ssub.s32 %s26, 1
        %s415 = sand.u32 %s39, 1
        %s416 = scalar_lea.sflag [#allocation4], %s415
        %s417 = sand.u32 %s39, 1
        %s418 = smul.addr %s417, 32
        %s419 = scalar_lea.vmem [#allocation3], %s418
        // Predicated region
        $region65: #{net_forward.1} parent=63 // pred_check
          %p420 = pneg %p52
        $region66: #{net_forward.1} parent=63 // pred_check_branch
          %422 = sbr.rel (%p420) target = $region68
        $region67: #{net_forward.1} parent=63 // pred_region
          %423 = dma.done %s416, 512
        $region68: #{net_forward.1} parent=63 // pred_fallthru
          _
        // Predicated region
        $region69: #{net_forward.1} parent=63 // pred_check
          %p424 = pneg %p73
        $region70: #{net_forward.1} parent=63 // pred_check_branch
          %426 = sbr.rel (%p424) target = $region72
        $region71: #{net_forward.1} parent=63 // pred_region
          %427 = dma.done [#allocation7], 5120
        $region72: #{net_forward.1} parent=63 // pred_fallthru
          _
        // Predicated region
        $region73: #{net_forward.1} parent=63 // pred_check
          %p428 = pneg %p115
        $region74: #{net_forward.1} parent=63 // pred_check_branch
          %430 = sbr.rel (%p428) target = $region76
        $region75: #{net_forward.1} parent=63 // pred_region
          %431 = dma.done [#allocation7], 14336
        $region76: #{net_forward.1} parent=63 // pred_fallthru
          _
        // Predicated region
        $region77: #{net_forward.1} parent=63 // pred_check
          %p432 = pneg %p157
        $region78: #{net_forward.1} parent=63 // pred_check_branch
          %434 = sbr.rel (%p432) target = $region80
        $region79: #{net_forward.1} parent=63 // pred_region
          %435 = dma.done [#allocation10], 6400
        $region80: #{net_forward.1} parent=63 // pred_fallthru
          _
        // Predicated region
        $region81: #{net_forward.1} parent=63 // pred_check
          %p436 = pneg %p199
        $region82: #{net_forward.1} parent=63 // pred_check_branch
          %438 = sbr.rel (%p436) target = $region84
        $region83: #{net_forward.1} parent=63 // pred_region
          %439 = dma.done [#allocation10], 2048
        $region84: #{net_forward.1} parent=63 // pred_fallthru
          _
        // Predicated region
        $region85: #{net_forward.1} parent=63 // pred_check
          %p440 = pneg %p241
        $region86: #{net_forward.1} parent=63 // pred_check_branch
          %442 = sbr.rel (%p440) target = $region88
        $region87: #{net_forward.1} parent=63 // pred_region
          %443 = dma.done [#allocation13], 2048
        $region88: #{net_forward.1} parent=63 // pred_fallthru
          _
        %s444 = sand.u32 %s39, 1
        %s445 = scalar_lea.sflag [#allocation4], %s444
        %s446 = sand.u32 %s39, 1
        %s447 = smul.addr %s446, 32
        %s448 = scalar_lea.vmem [#allocation3], %s447
        %p449 = pneg %p52
        %p450 = pneg %p49
        %p451 = pneg %p73
        %p452 = pneg %p70
        %p453 = pneg %p94
        %p454 = pneg %p91
        %p455 = pneg %p115
        %p456 = pneg %p112
        %p457 = pneg %p136
        %p458 = pneg %p133
        %p459 = pneg %p157
        %p460 = pneg %p154
        %p461 = pneg %p178
        %p462 = pneg %p175
        %p463 = pneg %p199
        %p464 = pneg %p196
        %p465 = pneg %p220
        %p466 = pneg %p217
        %p467 = pneg %p241
        %p468 = pneg %p238
        %p469 = pneg %p262
        %p470 = pneg %p259
        %p471 = pneg %p288
        %p472 = pneg %p285
        %s473 = sand.u32 %s275, 1
        %s474 = scalar_lea.sflag [#allocation5], %s473
        %s475 = sand.u32 %s275, 1
        %s476 = scalar_lea.vmem [#allocation14], %s475
        %v477 = vld [vmem:[%s419] ss:$2 sm:$0xff]
        %s478 = scalar_lea.vmem %s419, 16 [#allocation3]
        %v479 = vld [vmem:[%s478] ss:$2 sm:$0x3f]
        %s480 = scalar_lea.vmem %s419, 1 [#allocation3]
        %v481 = vld [vmem:[%s480] ss:$2 sm:$0xff]
        %s482 = scalar_lea.vmem %s419, 17 [#allocation3]
        %v483 = vld [vmem:[%s482] ss:$2 sm:$0x3f]
        %s484 = scalar_lea.vmem %s419, 2 [#allocation3]
        %v485 = vld [vmem:[%s484] ss:$2 sm:$0xff]
        %s486 = scalar_lea.vmem %s419, 18 [#allocation3]
        %v487 = vld [vmem:[%s486] ss:$2 sm:$0x3f]
        %s488 = scalar_lea.vmem %s419, 3 [#allocation3]
        %v489 = vld [vmem:[%s488] ss:$2 sm:$0xff]
        %s490 = scalar_lea.vmem %s419, 19 [#allocation3]
        %v491 = vld [vmem:[%s490] ss:$2 sm:$0x3f]
        %s492 = scalar_lea.vmem %s419, 4 [#allocation3]
        %v493 = vld [vmem:[%s492] ss:$2 sm:$0xff]
        %s494 = scalar_lea.vmem %s419, 20 [#allocation3]
        %v495 = vld [vmem:[%s494] ss:$2 sm:$0x3f]
        %498 = vrot.lane.b32.xlu0 %v481, 32
        %v499 = vpop.permute.xlu0 %498
        %500 = vrot.lane.b32.xlu0 %v483, 32
        %v501 = vpop.permute.xlu0 %500
        %506 = vrot.lane.b32.xlu0 %v485, 64
        %v507 = vpop.permute.xlu0 %506
        %508 = vrot.lane.b32.xlu0 %v487, 64
        %v509 = vpop.permute.xlu0 %508
        %514 = vrot.lane.b32.xlu0 %v489, 96
        %v515 = vpop.permute.xlu0 %514
        %516 = vrot.lane.b32.xlu0 %v491, 96
        %v517 = vpop.permute.xlu0 %516
        %vm520 = vcmask 261120
        %v521 = vsel %vm520, %v477, %v499
        %v522 = vsel %vm520, %v479, %v501
        %vm523 = vcmask 523264
        %v524 = vsel %vm523, %v521, %v507
        %v525 = vsel %vm523, %v522, %v509
        %vm526 = vcmask 785408
        %v527 = vsel %vm526, %v524, %v515
        %v528 = vsel %vm526, %v525, %v517
        %s529 = scalar_lea.vmem %s419, 5 [#allocation3]
        %v530 = vld [vmem:[%s529] ss:$2 sm:$0xff]
        %s531 = scalar_lea.vmem %s419, 21 [#allocation3]
        %v532 = vld [vmem:[%s531] ss:$2 sm:$0x3f]
        %533 = vrot.lane.b32.xlu0 %v485, 32
        %v534 = vpop.permute.xlu0 %533
        %535 = vrot.lane.b32.xlu0 %v487, 32
        %v536 = vpop.permute.xlu0 %535
        %539 = vrot.lane.b32.xlu0 %v489, 64
        %v540 = vpop.permute.xlu0 %539
        %541 = vrot.lane.b32.xlu0 %v491, 64
        %v542 = vpop.permute.xlu0 %541
        %547 = vrot.lane.b32.xlu0 %v493, 96
        %v548 = vpop.permute.xlu0 %547
        %549 = vrot.lane.b32.xlu0 %v495, 96
        %v550 = vpop.permute.xlu0 %549
        %v553 = vsel %vm520, %v481, %v534
        %v554 = vsel %vm520, %v483, %v536
        %v555 = vsel %vm523, %v553, %v540
        %v556 = vsel %vm523, %v554, %v542
        %v557 = vsel %vm526, %v555, %v548
        %v558 = vsel %vm526, %v556, %v550
        %v559 = vld [vmem:[#allocation6] sm:$0xff]
        %v560 = vld [vmem:[#allocation6 + $0x8] sm:$0xff]
        %v561 = vld [vmem:[#allocation6 + $0x10] sm:$0xff]
        %v562 = vld [vmem:[#allocation6 + $0x18] sm:$0xff]
        %v563 = vld [vmem:[#allocation6 + $0x20] sm:$0xff]
        %v564 = vld [vmem:[#allocation6 + $0x28] sm:$0xff]
        %v565 = vld [vmem:[#allocation6 + $0x30] sm:$0xff]
        %v566 = vld [vmem:[#allocation6 + $0x38] sm:$0xff]
        %v567 = vld [vmem:[#allocation6 + $0x40] sm:$0xff]
        %v568 = vld [vmem:[#allocation6 + $0x48] sm:$0xff]
        %v569 = vld [vmem:[#allocation6 + $0x50] sm:$0xff]
        %v570 = vld [vmem:[#allocation6 + $0x58] sm:$0xff]
        %v571 = vld [vmem:[#allocation6 + $0x60] sm:$0xff]
        %v572 = vld [vmem:[#allocation6 + $0x68] sm:$0xff]
        %v573 = vld [vmem:[#allocation6 + $0x70] sm:$0xff]
        %v574 = vld [vmem:[#allocation6 + $0x78] sm:$0xff]
        %v575 = vld [vmem:[#allocation6 + $0x80] sm:$0xff]
        %v576 = vld [vmem:[#allocation6 + $0x88] sm:$0xff]
        %v577 = vld [vmem:[#allocation6 + $0x90] sm:$0xff]
        %v578 = vld [vmem:[#allocation6 + $0x98] sm:$0xff]
        %v579 = vld [vmem:[#allocation6 + $0xa0] sm:$0xff]
        %v580 = vld [vmem:[#allocation6 + $0xa8] sm:$0xff]
        %v581 = vld [vmem:[#allocation6 + $0xb0] sm:$0xff]
        %v582 = vld [vmem:[#allocation6 + $0xb8] sm:$0xff]
        %v583 = vld [vmem:[#allocation6 + $0xc0] sm:$0xff]
        %v584 = vld [vmem:[#allocation6 + $0xc8] sm:$0xff]
        %v585 = vld [vmem:[#allocation6 + $0xd0] sm:$0xff]
        %v586 = vld [vmem:[#allocation6 + $0xd8] sm:$0xff]
        %v587 = vld [vmem:[#allocation6 + $0xe0] sm:$0xff]
        %v588 = vld [vmem:[#allocation6 + $0xe8] sm:$0xff]
        %v589 = vld [vmem:[#allocation6 + $0xf0] sm:$0xff]
        %v590 = vld [vmem:[#allocation6 + $0xf8] sm:$0xff]
        %v591 = vld [vmem:[#allocation6 + $0x100] sm:$0xff]
        %v592 = vld [vmem:[#allocation6 + $0x108] sm:$0xff]
        %v593 = vld [vmem:[#allocation6 + $0x110] sm:$0xff]
        %v594 = vld [vmem:[#allocation6 + $0x118] sm:$0xff]
        %v595 = vld [vmem:[#allocation6 + $0x120] sm:$0xff]
        %v596 = vld [vmem:[#allocation6 + $0x128] sm:$0xff]
        %v597 = vld [vmem:[#allocation6 + $0x130] sm:$0xff]
        %v598 = vld [vmem:[#allocation6 + $0x138] sm:$0xff]
        %v599 = vld [vmem:[%s2] sm:$0x3]
        %v601 = vlaneseq
        %v602 = vshrl.u32 %v601, 7
        %v603 = vsub.s32 0, %v602
        %v604 = vrot.slane %v599, %v603
        %v605 = vlaneseq
        %v606 = vshrl.u32 %v605, 7
        %v607 = vsub.s32 1, %v606
        %v608 = vrot.slane %v599, %v607
        %v611 = vsel %vm520, %v493, 0
        %v613 = vsel %vm520, %v495, 0
        %615 = vmatprep.subr.mxu0 %v590
        %616 = vmatpush1.msra.mxu0 %v589
        %617 = vmatprep.subr.mxu0 %v588
        %618 = vmatpush1.msra.mxu0 %v587
        %619 = vmatprep.subr.mxu0 %v586
        %620 = vmatpush1.msra.mxu0 %v585
        %621 = vmatprep.subr.mxu0 %v584
        %622 = vmatpush1.msra.mxu0 %v583
        %623 = vmatprep.subr.mxu0 %v582
        %624 = vmatpush1.msra.mxu0 %v581
        %625 = vmatprep.subr.mxu0 %v580
        %626 = vmatpush1.msra.mxu0 %v579
        %627 = vmatprep.subr.mxu0 %v578
        %628 = vmatpush1.msra.mxu0 %v577
        %629 = vmatprep.subr.mxu0 %v576
        %630 = vmatpush1.msra.mxu0 %v575
        %631 = vmatprep.subr.mxu0 %v574
        %632 = vmatpush1.msra.mxu0 %v573
        %633 = vmatprep.subr.mxu0 %v572
        %634 = vmatpush1.msra.mxu0 %v571
        %635 = vmatprep.subr.mxu0 %v570
        %636 = vmatpush1.msra.mxu0 %v569
        %637 = vmatprep.subr.mxu0 %v568
        %638 = vmatpush1.msra.mxu0 %v567
        %639 = vmatprep.subr.mxu0 %v566
        %640 = vmatpush1.msra.mxu0 %v565
        %641 = vmatprep.subr.mxu0 %v564
        %642 = vmatpush1.msra.mxu0 %v563
        %643 = vmatprep.subr.mxu0 %v562
        %644 = vmatpush1.msra.mxu0 %v561
        %645 = vmatprep.subr.mxu0 %v560
        %646 = vmatpush1.msra.mxu0 %v559
        %647 = vmatprep.subr.mxu0 0.0
        %648 = vmatpush2.msra.mxu0 0.0
        %649 = vmatprep.subr.mxu0 0.0
        %650 = vmatpush2.msra.mxu0 0.0
        %651 = vmatprep.subr.mxu0 0.0
        %652 = vmatpush2.msra.mxu0 0.0
        %653 = vmatprep.subr.mxu0 0.0
        %654 = vmatpush2.msra.mxu0 0.0
        %655 = vmatprep.subr.mxu0 0.0
        %656 = vmatpush2.msra.mxu0 0.0
        %657 = vmatprep.subr.mxu0 0.0
        %658 = vmatpush2.msra.mxu0 0.0
        %659 = vmatprep.subr.mxu0 0.0
        %660 = vmatpush2.msra.mxu0 0.0
        %661 = vmatprep.subr.mxu0 0.0
        %662 = vmatpush2.msra.mxu0 0.0
        %663 = vmatprep.subr.mxu0 0.0
        %664 = vmatpush2.msra.mxu0 0.0
        %665 = vmatprep.subr.mxu0 0.0
        %666 = vmatpush2.msra.mxu0 0.0
        %667 = vmatprep.subr.mxu0 0.0
        %668 = vmatpush2.msra.mxu0 0.0
        %669 = vmatprep.subr.mxu0 0.0
        %670 = vmatpush2.msra.mxu0 0.0
        %671 = vmatprep.subr.mxu0 %v598
        %672 = vmatpush2.msra.mxu0 %v597
        %673 = vmatprep.subr.mxu0 %v596
        %674 = vmatpush2.msra.mxu0 %v595
        %675 = vmatprep.subr.mxu0 %v594
        %676 = vmatpush2.msra.mxu0 %v593
        %677 = vmatprep.subr.mxu0 %v592
        %678 = vmatpush2.msra.mxu0 %v591
        %679 = vmatprep.mubr.f32.mxu0 %v611
        %680 = vmatmul.mubr.f32.gmra.mxu0 %v527
        %v681 = vpop.f32.mrf.mxu0
        %v682 = vadd.f32 %v604, %v681
        %v683 = vpop.f32.mrf.mxu0
        %v684 = vadd.f32 %v608, %v683
        %685 = vmatprep.mubr.f32.mxu0 %v613
        %686 = vmatmul.mubr.f32.gmra.mxu0 %v528
        %v687 = vpop.f32.mrf.mxu0
        %v688 = vadd.f32 %v604, %v687
        %v689 = vpop.f32.mrf.mxu0
        %v690 = vadd.f32 %v608, %v689
        %691 = vdwg.mxu0
        %v692 = vmax.f32 %v682, 0.0
        %v693 = vmax.f32 %v684, 0.0
        %v694 = vmax.f32 %v688, 0.0
        %v695 = vmax.f32 %v690, 0.0
        %v697 = vsel %vm520, %v530, 0
        %v700 = vsel %vm520, %v532, 0
        %702 = vmatprep.subr.mxu0 %v590
        %703 = vmatpush1.msra.mxu0 %v589
        %704 = vmatprep.subr.mxu0 %v588
        %705 = vmatpush1.msra.mxu0 %v587
        %706 = vmatprep.subr.mxu0 %v586
        %707 = vmatpush1.msra.mxu0 %v585
        %708 = vmatprep.subr.mxu0 %v584
        %709 = vmatpush1.msra.mxu0 %v583
        %710 = vmatprep.subr.mxu0 %v582
        %711 = vmatpush1.msra.mxu0 %v581
        %712 = vmatprep.subr.mxu0 %v580
        %713 = vmatpush1.msra.mxu0 %v579
        %714 = vmatprep.subr.mxu0 %v578
        %715 = vmatpush1.msra.mxu0 %v577
        %716 = vmatprep.subr.mxu0 %v576
        %717 = vmatpush1.msra.mxu0 %v575
        %718 = vmatprep.subr.mxu0 %v574
        %719 = vmatpush1.msra.mxu0 %v573
        %720 = vmatprep.subr.mxu0 %v572
        %721 = vmatpush1.msra.mxu0 %v571
        %722 = vmatprep.subr.mxu0 %v570
        %723 = vmatpush1.msra.mxu0 %v569
        %724 = vmatprep.subr.mxu0 %v568
        %725 = vmatpush1.msra.mxu0 %v567
        %726 = vmatprep.subr.mxu0 %v566
        %727 = vmatpush1.msra.mxu0 %v565
        %728 = vmatprep.subr.mxu0 %v564
        %729 = vmatpush1.msra.mxu0 %v563
        %730 = vmatprep.subr.mxu0 %v562
        %731 = vmatpush1.msra.mxu0 %v561
        %732 = vmatprep.subr.mxu0 %v560
        %733 = vmatpush1.msra.mxu0 %v559
        %734 = vmatprep.subr.mxu0 0.0
        %735 = vmatpush2.msra.mxu0 0.0
        %736 = vmatprep.subr.mxu0 0.0
        %737 = vmatpush2.msra.mxu0 0.0
        %738 = vmatprep.subr.mxu0 0.0
        %739 = vmatpush2.msra.mxu0 0.0
        %740 = vmatprep.subr.mxu0 0.0
        %741 = vmatpush2.msra.mxu0 0.0
        %742 = vmatprep.subr.mxu0 0.0
        %743 = vmatpush2.msra.mxu0 0.0
        %744 = vmatprep.subr.mxu0 0.0
        %745 = vmatpush2.msra.mxu0 0.0
        %746 = vmatprep.subr.mxu0 0.0
        %747 = vmatpush2.msra.mxu0 0.0
        %748 = vmatprep.subr.mxu0 0.0
        %749 = vmatpush2.msra.mxu0 0.0
        %750 = vmatprep.subr.mxu0 0.0
        %751 = vmatpush2.msra.mxu0 0.0
        %752 = vmatprep.subr.mxu0 0.0
        %753 = vmatpush2.msra.mxu0 0.0
        %754 = vmatprep.subr.mxu0 0.0
        %755 = vmatpush2.msra.mxu0 0.0
        %756 = vmatprep.subr.mxu0 0.0
        %757 = vmatpush2.msra.mxu0 0.0
        %758 = vmatprep.subr.mxu0 %v598
        %759 = vmatpush2.msra.mxu0 %v597
        %760 = vmatprep.subr.mxu0 %v596
        %761 = vmatpush2.msra.mxu0 %v595
        %762 = vmatprep.subr.mxu0 %v594
        %763 = vmatpush2.msra.mxu0 %v593
        %764 = vmatprep.subr.mxu0 %v592
        %765 = vmatpush2.msra.mxu0 %v591
        %766 = vmatprep.mubr.f32.mxu0 %v697
        %767 = vmatmul.mubr.f32.gmra.mxu0 %v557
        %v768 = vpop.f32.mrf.mxu0
        %v769 = vadd.f32 %v604, %v768
        %v770 = vpop.f32.mrf.mxu0
        %v771 = vadd.f32 %v608, %v770
        %772 = vmatprep.mubr.f32.mxu0 %v700
        %773 = vmatmul.mubr.f32.gmra.mxu0 %v558
        %v774 = vpop.f32.mrf.mxu0
        %v775 = vadd.f32 %v604, %v774
        %v776 = vpop.f32.mrf.mxu0
        %v777 = vadd.f32 %v608, %v776
        %778 = vdwg.mxu0
        %v779 = vmax.f32 %v769, 0.0
        %v780 = vmax.f32 %v771, 0.0
        %v781 = vmax.f32 %v775, 0.0
        %v782 = vmax.f32 %v777, 0.0
        %v783 = vmax.f32 %v692, %v693
        %v784 = vmax.f32 %v694, %v695
        %v785 = vmax.f32 %v779, %v780
        %v786 = vmax.f32 %v781, %v782
        %v787 = vmax.f32 %v783, %v785
        %v788 = vmax.f32 %v784, %v786
        %vm789 = vcmask 687104
        %790 = vst.msk [vmem:[#allocation2] sm:$0xff] %vm789, %v787
        %vm791 = vcmask 685056
        %792 = vst.msk [vmem:[#allocation2 + $0x8] sm:$0x3f] %vm791, %v788
        %v793 = vld [vmem:[#allocation2] ss:$2 sm:$0x1f]
        %s794 = scalar_lea.vmem [#allocation2], 1
        %v795 = vld [vmem:[%s794] ss:$2 sm:$0x1f]
        %s796 = scalar_lea.vmem [#allocation2], 2
        %v797 = vld [vmem:[%s796] ss:$2 sm:$0x1f]
        %s798 = scalar_lea.vmem [#allocation2], 3
        %v799 = vld [vmem:[%s798] ss:$2 sm:$0x1f]
        %s800 = scalar_lea.vmem [#allocation2], 4
        %v801 = vld [vmem:[%s800] ss:$2 sm:$0x1f]
        %803 = vrot.lane.b32.xlu0 %v795, 84
        %v804 = vpop.permute.xlu0 %803
        %807 = vrot.lane.b32.xlu0 %v797, 40
        %v808 = vpop.permute.xlu0 %807
        %811 = vrot.lane.b32.xlu0 %v799, 124
        %v812 = vpop.permute.xlu0 %811
        %815 = vrot.lane.b32.xlu0 %v801, 80
        %v816 = vpop.permute.xlu0 %815
        %v818 = vsel %vm789, %v793, %v804
        %vm819 = vcmask 326656
        %v820 = vsel %vm819, %v804, %v808
        %vm821 = vcmask 1014784
        %v822 = vsel %vm821, %v820, %v812
        %vm823 = vcmask 654336
        %v824 = vsel %vm823, %v812, %v816
        %vm825 = vcmask 293888
        %v826 = vsel %vm825, %v816, 0.0
        %s827 = scalar_lea.vmem [#allocation2], 5
        %v828 = vld [vmem:[%s827] ss:$2 sm:$0x1f]
        %829 = vrot.lane.b32.xlu0 %v797, 84
        %v830 = vpop.permute.xlu0 %829
        %832 = vrot.lane.b32.xlu0 %v799, 40
        %v833 = vpop.permute.xlu0 %832
        %835 = vrot.lane.b32.xlu0 %v801, 124
        %v836 = vpop.permute.xlu0 %835
        %839 = vrot.lane.b32.xlu0 %v828, 80
        %v840 = vpop.permute.xlu0 %839
        %v842 = vsel %vm789, %v795, %v830
        %v843 = vsel %vm819, %v830, %v833
        %v844 = vsel %vm821, %v843, %v836
        %v845 = vsel %vm823, %v836, %v840
        %v846 = vsel %vm825, %v840, 0.0
        %v847 = vld [vmem:[#allocation8] sm:$0xff]
        %v848 = vld [vmem:[#allocation8 + $0x8] sm:$0xff]
        %v849 = vld [vmem:[#allocation8 + $0x10] sm:$0xff]
        %v850 = vld [vmem:[#allocation8 + $0x18] sm:$0xff]
        %v851 = vld [vmem:[#allocation8 + $0x20] sm:$0xff]
        %v852 = vld [vmem:[#allocation8 + $0x28] sm:$0xff]
        %v853 = vld [vmem:[#allocation8 + $0x30] sm:$0xff]
        %v854 = vld [vmem:[#allocation8 + $0x38] sm:$0xff]
        %v855 = vld [vmem:[#allocation8 + $0x40] sm:$0xff]
        %v856 = vld [vmem:[#allocation8 + $0x48] sm:$0xff]
        %v857 = vld [vmem:[#allocation8 + $0x50] sm:$0xff]
        %v858 = vld [vmem:[#allocation8 + $0x58] sm:$0xff]
        %v859 = vld [vmem:[#allocation8 + $0x60] sm:$0xff]
        %v860 = vld [vmem:[#allocation8 + $0x68] sm:$0xff]
        %v861 = vld [vmem:[#allocation8 + $0x70] sm:$0xff]
        %v862 = vld [vmem:[#allocation8 + $0x78] sm:$0xff]
        %v863 = vld [vmem:[#allocation8 + $0x80] sm:$0xff]
        %v864 = vld [vmem:[#allocation8 + $0x88] sm:$0xff]
        %v865 = vld [vmem:[#allocation8 + $0x90] sm:$0xff]
        %v866 = vld [vmem:[#allocation8 + $0x98] sm:$0xff]
        %v867 = vld [vmem:[#allocation8 + $0xa0] sm:$0xff]
        %v868 = vld [vmem:[#allocation8 + $0xa8] sm:$0xff]
        %v869 = vld [vmem:[#allocation8 + $0xb0] sm:$0xff]
        %v870 = vld [vmem:[#allocation8 + $0xb8] sm:$0xff]
        %v871 = vld [vmem:[#allocation8 + $0xc0] sm:$0xff]
        %v872 = vld [vmem:[#allocation8 + $0xc8] sm:$0xff]
        %v873 = vld [vmem:[#allocation8 + $0xd0] sm:$0xff]
        %v874 = vld [vmem:[#allocation8 + $0xd8] sm:$0xff]
        %v875 = vld [vmem:[#allocation8 + $0xe0] sm:$0xff]
        %v876 = vld [vmem:[#allocation8 + $0xe8] sm:$0xff]
        %v877 = vld [vmem:[#allocation8 + $0xf0] sm:$0xff]
        %v878 = vld [vmem:[#allocation8 + $0xf8] sm:$0xff]
        %v879 = vld [vmem:[#allocation8 + $0x100] sm:$0xff]
        %v880 = vld [vmem:[#allocation8 + $0x108] sm:$0xff]
        %v881 = vld [vmem:[#allocation8 + $0x110] sm:$0xff]
        %v882 = vld [vmem:[#allocation8 + $0x118] sm:$0xff]
        %v883 = vld [vmem:[#allocation8 + $0x120] sm:$0xff]
        %v884 = vld [vmem:[#allocation8 + $0x128] sm:$0xff]
        %v885 = vld [vmem:[#allocation8 + $0x130] sm:$0xff]
        %v886 = vld [vmem:[#allocation8 + $0x138] sm:$0xff]
        %v887 = vld [vmem:[#allocation8 + $0x140] sm:$0xff]
        %v888 = vld [vmem:[#allocation8 + $0x148] sm:$0xff]
        %v889 = vld [vmem:[#allocation8 + $0x150] sm:$0xff]
        %v890 = vld [vmem:[#allocation8 + $0x158] sm:$0xff]
        %v891 = vld [vmem:[#allocation8 + $0x160] sm:$0xff]
        %v892 = vld [vmem:[#allocation8 + $0x168] sm:$0xff]
        %v893 = vld [vmem:[#allocation8 + $0x170] sm:$0xff]
        %v894 = vld [vmem:[#allocation8 + $0x178] sm:$0xff]
        %v895 = vld [vmem:[#allocation8 + $0x180] sm:$0xff]
        %v896 = vld [vmem:[#allocation8 + $0x188] sm:$0xff]
        %v897 = vld [vmem:[#allocation8 + $0x190] sm:$0xff]
        %v898 = vld [vmem:[#allocation8 + $0x198] sm:$0xff]
        %v899 = vld [vmem:[#allocation8 + $0x1a0] sm:$0xff]
        %v900 = vld [vmem:[#allocation8 + $0x1a8] sm:$0xff]
        %v901 = vld [vmem:[#allocation8 + $0x1b0] sm:$0xff]
        %v902 = vld [vmem:[#allocation8 + $0x1b8] sm:$0xff]
        %v903 = vld [vmem:[#allocation8 + $0x1c0] sm:$0xff]
        %v904 = vld [vmem:[#allocation8 + $0x1c8] sm:$0xff]
        %v905 = vld [vmem:[#allocation8 + $0x1d0] sm:$0xff]
        %v906 = vld [vmem:[#allocation8 + $0x1d8] sm:$0xff]
        %v907 = vld [vmem:[#allocation8 + $0x1e0] sm:$0xff]
        %v908 = vld [vmem:[#allocation8 + $0x1e8] sm:$0xff]
        %v909 = vld [vmem:[#allocation8 + $0x1f0] sm:$0xff]
        %v910 = vld [vmem:[#allocation8 + $0x1f8] sm:$0xff]
        %v911 = vld [vmem:[#allocation8 + $0x200] sm:$0xff]
        %v912 = vld [vmem:[#allocation8 + $0x208] sm:$0xff]
        %v913 = vld [vmem:[#allocation8 + $0x210] sm:$0xff]
        %v914 = vld [vmem:[#allocation8 + $0x218] sm:$0xff]
        %v915 = vld [vmem:[#allocation8 + $0x220] sm:$0xff]
        %v916 = vld [vmem:[#allocation8 + $0x228] sm:$0xff]
        %v917 = vld [vmem:[#allocation8 + $0x230] sm:$0xff]
        %v918 = vld [vmem:[#allocation8 + $0x238] sm:$0xff]
        %v919 = vld [vmem:[#allocation8 + $0x240] sm:$0xff]
        %v920 = vld [vmem:[#allocation8 + $0x248] sm:$0xff]
        %v921 = vld [vmem:[#allocation8 + $0x250] sm:$0xff]
        %v922 = vld [vmem:[#allocation8 + $0x258] sm:$0xff]
        %v923 = vld [vmem:[#allocation8 + $0x260] sm:$0xff]
        %v924 = vld [vmem:[#allocation8 + $0x268] sm:$0xff]
        %v925 = vld [vmem:[#allocation8 + $0x270] sm:$0xff]
        %v926 = vld [vmem:[#allocation8 + $0x278] sm:$0xff]
        %v927 = vld [vmem:[#allocation8 + $0x280] sm:$0xff]
        %v928 = vld [vmem:[#allocation8 + $0x288] sm:$0xff]
        %v929 = vld [vmem:[#allocation8 + $0x290] sm:$0xff]
        %v930 = vld [vmem:[#allocation8 + $0x298] sm:$0xff]
        %v931 = vld [vmem:[#allocation8 + $0x2a0] sm:$0xff]
        %v932 = vld [vmem:[#allocation8 + $0x2a8] sm:$0xff]
        %v933 = vld [vmem:[#allocation8 + $0x2b0] sm:$0xff]
        %v934 = vld [vmem:[#allocation8 + $0x2b8] sm:$0xff]
        %v935 = vld [vmem:[#allocation8 + $0x2c0] sm:$0xff]
        %v936 = vld [vmem:[#allocation8 + $0x2c8] sm:$0xff]
        %v937 = vld [vmem:[#allocation8 + $0x2d0] sm:$0xff]
        %v938 = vld [vmem:[#allocation8 + $0x2d8] sm:$0xff]
        %v939 = vld [vmem:[#allocation8 + $0x2e0] sm:$0xff]
        %v940 = vld [vmem:[#allocation8 + $0x2e8] sm:$0xff]
        %v941 = vld [vmem:[#allocation8 + $0x2f0] sm:$0xff]
        %v942 = vld [vmem:[#allocation8 + $0x2f8] sm:$0xff]
        %v943 = vld [vmem:[#allocation8 + $0x300] sm:$0xff]
        %v944 = vld [vmem:[#allocation8 + $0x308] sm:$0xff]
        %v945 = vld [vmem:[#allocation8 + $0x310] sm:$0xff]
        %v946 = vld [vmem:[#allocation8 + $0x318] sm:$0xff]
        %v947 = vld [vmem:[#allocation8 + $0x320] sm:$0xff]
        %v948 = vld [vmem:[#allocation8 + $0x328] sm:$0xff]
        %v949 = vld [vmem:[#allocation8 + $0x330] sm:$0xff]
        %v950 = vld [vmem:[#allocation8 + $0x338] sm:$0xff]
        %v951 = vld [vmem:[#allocation8 + $0x340] sm:$0xff]
        %v952 = vld [vmem:[#allocation8 + $0x348] sm:$0xff]
        %v953 = vld [vmem:[#allocation8 + $0x350] sm:$0xff]
        %v954 = vld [vmem:[#allocation8 + $0x358] sm:$0xff]
        %v955 = vld [vmem:[#allocation8 + $0x360] sm:$0xff]
        %v956 = vld [vmem:[#allocation8 + $0x368] sm:$0xff]
        %v957 = vld [vmem:[#allocation8 + $0x370] sm:$0xff]
        %v958 = vld [vmem:[#allocation8 + $0x378] sm:$0xff]
        %v959 = vld [vmem:[%s4] sm:$0x3]
        %v961 = vlaneseq
        %v962 = vshrl.u32 %v961, 7
        %v963 = vsub.s32 0, %v962
        %v964 = vrot.slane %v959, %v963
        %v965 = vlaneseq
        %v966 = vshrl.u32 %v965, 7
        %v967 = vsub.s32 1, %v966
        %v968 = vrot.slane %v959, %v967
        %v972 = vsel %vm523, %v826, 0
        %974 = vmatprep.subr.mxu0 %v878
        %975 = vmatpush1.msra.mxu0 %v877
        %976 = vmatprep.subr.mxu0 %v876
        %977 = vmatpush1.msra.mxu0 %v875
        %978 = vmatprep.subr.mxu0 %v874
        %979 = vmatpush1.msra.mxu0 %v873
        %980 = vmatprep.subr.mxu0 %v872
        %981 = vmatpush1.msra.mxu0 %v871
        %982 = vmatprep.subr.mxu0 %v870
        %983 = vmatpush1.msra.mxu0 %v869
        %984 = vmatprep.subr.mxu0 %v868
        %985 = vmatpush1.msra.mxu0 %v867
        %986 = vmatprep.subr.mxu0 %v866
        %987 = vmatpush1.msra.mxu0 %v865
        %988 = vmatprep.subr.mxu0 %v864
        %989 = vmatpush1.msra.mxu0 %v863
        %990 = vmatprep.subr.mxu0 %v862
        %991 = vmatpush1.msra.mxu0 %v861
        %992 = vmatprep.subr.mxu0 %v860
        %993 = vmatpush1.msra.mxu0 %v859
        %994 = vmatprep.subr.mxu0 %v858
        %995 = vmatpush1.msra.mxu0 %v857
        %996 = vmatprep.subr.mxu0 %v856
        %997 = vmatpush1.msra.mxu0 %v855
        %998 = vmatprep.subr.mxu0 %v854
        %999 = vmatpush1.msra.mxu0 %v853
        %1000 = vmatprep.subr.mxu0 %v852
        %1001 = vmatpush1.msra.mxu0 %v851
        %1002 = vmatprep.subr.mxu0 %v850
        %1003 = vmatpush1.msra.mxu0 %v849
        %1004 = vmatprep.subr.mxu0 %v848
        %1005 = vmatpush1.msra.mxu0 %v847
        %1006 = vmatprep.subr.mxu0 %v910
        %1007 = vmatpush2.msra.mxu0 %v909
        %1008 = vmatprep.subr.mxu0 %v908
        %1009 = vmatpush2.msra.mxu0 %v907
        %1010 = vmatprep.subr.mxu0 %v906
        %1011 = vmatpush2.msra.mxu0 %v905
        %1012 = vmatprep.subr.mxu0 %v904
        %1013 = vmatpush2.msra.mxu0 %v903
        %1014 = vmatprep.subr.mxu0 %v902
        %1015 = vmatpush2.msra.mxu0 %v901
        %1016 = vmatprep.subr.mxu0 %v900
        %1017 = vmatpush2.msra.mxu0 %v899
        %1018 = vmatprep.subr.mxu0 %v898
        %1019 = vmatpush2.msra.mxu0 %v897
        %1020 = vmatprep.subr.mxu0 %v896
        %1021 = vmatpush2.msra.mxu0 %v895
        %1022 = vmatprep.subr.mxu0 %v894
        %1023 = vmatpush2.msra.mxu0 %v893
        %1024 = vmatprep.subr.mxu0 %v892
        %1025 = vmatpush2.msra.mxu0 %v891
        %1026 = vmatprep.subr.mxu0 %v890
        %1027 = vmatpush2.msra.mxu0 %v889
        %1028 = vmatprep.subr.mxu0 %v888
        %1029 = vmatpush2.msra.mxu0 %v887
        %1030 = vmatprep.subr.mxu0 %v886
        %1031 = vmatpush2.msra.mxu0 %v885
        %1032 = vmatprep.subr.mxu0 %v884
        %1033 = vmatpush2.msra.mxu0 %v883
        %1034 = vmatprep.subr.mxu0 %v882
        %1035 = vmatpush2.msra.mxu0 %v881
        %1036 = vmatprep.subr.mxu0 %v880
        %1037 = vmatpush2.msra.mxu0 %v879
        %1038 = vmatprep.mubr.f32.mxu0 %v822
        %1039 = vmatmul.mubr.f32.gmra.mxu0 %v818
        %v1040 = vpop.f32.mrf.mxu0
        %v1041 = vadd.f32 %v964, %v1040
        %v1042 = vpop.f32.mrf.mxu0
        %v1043 = vadd.f32 %v968, %v1042
        %1044 = vdwg.mxu0
        %1045 = vmatprep.subr.mxu0 %v942
        %1046 = vmatpush1.msra.mxu0 %v941
        %1047 = vmatprep.subr.mxu0 %v940
        %1048 = vmatpush1.msra.mxu0 %v939
        %1049 = vmatprep.subr.mxu0 %v938
        %1050 = vmatpush1.msra.mxu0 %v937
        %1051 = vmatprep.subr.mxu0 %v936
        %1052 = vmatpush1.msra.mxu0 %v935
        %1053 = vmatprep.subr.mxu0 %v934
        %1054 = vmatpush1.msra.mxu0 %v933
        %1055 = vmatprep.subr.mxu0 %v932
        %1056 = vmatpush1.msra.mxu0 %v931
        %1057 = vmatprep.subr.mxu0 %v930
        %1058 = vmatpush1.msra.mxu0 %v929
        %1059 = vmatprep.subr.mxu0 %v928
        %1060 = vmatpush1.msra.mxu0 %v927
        %1061 = vmatprep.subr.mxu0 %v926
        %1062 = vmatpush1.msra.mxu0 %v925
        %1063 = vmatprep.subr.mxu0 %v924
        %1064 = vmatpush1.msra.mxu0 %v923
        %1065 = vmatprep.subr.mxu0 %v922
        %1066 = vmatpush1.msra.mxu0 %v921
        %1067 = vmatprep.subr.mxu0 %v920
        %1068 = vmatpush1.msra.mxu0 %v919
        %1069 = vmatprep.subr.mxu0 %v918
        %1070 = vmatpush1.msra.mxu0 %v917
        %1071 = vmatprep.subr.mxu0 %v916
        %1072 = vmatpush1.msra.mxu0 %v915
        %1073 = vmatprep.subr.mxu0 %v914
        %1074 = vmatpush1.msra.mxu0 %v913
        %1075 = vmatprep.subr.mxu0 %v912
        %1076 = vmatpush1.msra.mxu0 %v911
        %1077 = vmatprep.subr.mxu0 0.0
        %1078 = vmatpush2.msra.mxu0 0.0
        %1079 = vmatprep.subr.mxu0 0.0
        %1080 = vmatpush2.msra.mxu0 0.0
        %1081 = vmatprep.subr.mxu0 0.0
        %1082 = vmatpush2.msra.mxu0 0.0
        %1083 = vmatprep.subr.mxu0 0.0
        %1084 = vmatpush2.msra.mxu0 0.0
        %1085 = vmatprep.subr.mxu0 0.0
        %1086 = vmatpush2.msra.mxu0 0.0
        %1087 = vmatprep.subr.mxu0 0.0
        %1088 = vmatpush2.msra.mxu0 0.0
        %1089 = vmatprep.subr.mxu0 0.0
        %1090 = vmatpush2.msra.mxu0 0.0
        %1091 = vmatprep.subr.mxu0 0.0
        %1092 = vmatpush2.msra.mxu0 0.0
        %1093 = vmatprep.subr.mxu0 %v958
        %1094 = vmatpush2.msra.mxu0 %v957
        %1095 = vmatprep.subr.mxu0 %v956
        %1096 = vmatpush2.msra.mxu0 %v955
        %1097 = vmatprep.subr.mxu0 %v954
        %1098 = vmatpush2.msra.mxu0 %v953
        %1099 = vmatprep.subr.mxu0 %v952
        %1100 = vmatpush2.msra.mxu0 %v951
        %1101 = vmatprep.subr.mxu0 %v950
        %1102 = vmatpush2.msra.mxu0 %v949
        %1103 = vmatprep.subr.mxu0 %v948
        %1104 = vmatpush2.msra.mxu0 %v947
        %1105 = vmatprep.subr.mxu0 %v946
        %1106 = vmatpush2.msra.mxu0 %v945
        %1107 = vmatprep.subr.mxu0 %v944
        %1108 = vmatpush2.msra.mxu0 %v943
        %1109 = vmatprep.mubr.f32.mxu0 %v972
        %1110 = vmatmul.mubr.f32.gmra.mxu0 %v824
        %v1111 = vpop.f32.mrf.mxu0
        %v1112 = vadd.f32 %v1041, %v1111
        %v1113 = vpop.f32.mrf.mxu0
        %v1114 = vadd.f32 %v1043, %v1113
        %1115 = vdwg.mxu0
        %v1116 = vmax.f32 %v1112, 0.0
        %v1117 = vmax.f32 %v1114, 0.0
        %v1119 = vsel %vm523, %v846, 0
        %1121 = vmatprep.subr.mxu0 %v878
        %1122 = vmatpush1.msra.mxu0 %v877
        %1123 = vmatprep.subr.mxu0 %v876
        %1124 = vmatpush1.msra.mxu0 %v875
        %1125 = vmatprep.subr.mxu0 %v874
        %1126 = vmatpush1.msra.mxu0 %v873
        %1127 = vmatprep.subr.mxu0 %v872
        %1128 = vmatpush1.msra.mxu0 %v871
        %1129 = vmatprep.subr.mxu0 %v870
        %1130 = vmatpush1.msra.mxu0 %v869
        %1131 = vmatprep.subr.mxu0 %v868
        %1132 = vmatpush1.msra.mxu0 %v867
        %1133 = vmatprep.subr.mxu0 %v866
        %1134 = vmatpush1.msra.mxu0 %v865
        %1135 = vmatprep.subr.mxu0 %v864
        %1136 = vmatpush1.msra.mxu0 %v863
        %1137 = vmatprep.subr.mxu0 %v862
        %1138 = vmatpush1.msra.mxu0 %v861
        %1139 = vmatprep.subr.mxu0 %v860
        %1140 = vmatpush1.msra.mxu0 %v859
        %1141 = vmatprep.subr.mxu0 %v858
        %1142 = vmatpush1.msra.mxu0 %v857
        %1143 = vmatprep.subr.mxu0 %v856
        %1144 = vmatpush1.msra.mxu0 %v855
        %1145 = vmatprep.subr.mxu0 %v854
        %1146 = vmatpush1.msra.mxu0 %v853
        %1147 = vmatprep.subr.mxu0 %v852
        %1148 = vmatpush1.msra.mxu0 %v851
        %1149 = vmatprep.subr.mxu0 %v850
        %1150 = vmatpush1.msra.mxu0 %v849
        %1151 = vmatprep.subr.mxu0 %v848
        %1152 = vmatpush1.msra.mxu0 %v847
        %1153 = vmatprep.subr.mxu0 %v910
        %1154 = vmatpush2.msra.mxu0 %v909
        %1155 = vmatprep.subr.mxu0 %v908
        %1156 = vmatpush2.msra.mxu0 %v907
        %1157 = vmatprep.subr.mxu0 %v906
        %1158 = vmatpush2.msra.mxu0 %v905
        %1159 = vmatprep.subr.mxu0 %v904
        %1160 = vmatpush2.msra.mxu0 %v903
        %1161 = vmatprep.subr.mxu0 %v902
        %1162 = vmatpush2.msra.mxu0 %v901
        %1163 = vmatprep.subr.mxu0 %v900
        %1164 = vmatpush2.msra.mxu0 %v899
        %1165 = vmatprep.subr.mxu0 %v898
        %1166 = vmatpush2.msra.mxu0 %v897
        %1167 = vmatprep.subr.mxu0 %v896
        %1168 = vmatpush2.msra.mxu0 %v895
        %1169 = vmatprep.subr.mxu0 %v894
        %1170 = vmatpush2.msra.mxu0 %v893
        %1171 = vmatprep.subr.mxu0 %v892
        %1172 = vmatpush2.msra.mxu0 %v891
        %1173 = vmatprep.subr.mxu0 %v890
        %1174 = vmatpush2.msra.mxu0 %v889
        %1175 = vmatprep.subr.mxu0 %v888
        %1176 = vmatpush2.msra.mxu0 %v887
        %1177 = vmatprep.subr.mxu0 %v886
        %1178 = vmatpush2.msra.mxu0 %v885
        %1179 = vmatprep.subr.mxu0 %v884
        %1180 = vmatpush2.msra.mxu0 %v883
        %1181 = vmatprep.subr.mxu0 %v882
        %1182 = vmatpush2.msra.mxu0 %v881
        %1183 = vmatprep.subr.mxu0 %v880
        %1184 = vmatpush2.msra.mxu0 %v879
        %1185 = vmatprep.mubr.f32.mxu0 %v844
        %1186 = vmatmul.mubr.f32.gmra.mxu0 %v842
        %v1187 = vpop.f32.mrf.mxu0
        %v1188 = vadd.f32 %v964, %v1187
        %v1189 = vpop.f32.mrf.mxu0
        %v1190 = vadd.f32 %v968, %v1189
        %1191 = vdwg.mxu0
        %1192 = vmatprep.subr.mxu0 %v942
        %1193 = vmatpush1.msra.mxu0 %v941
        %1194 = vmatprep.subr.mxu0 %v940
        %1195 = vmatpush1.msra.mxu0 %v939
        %1196 = vmatprep.subr.mxu0 %v938
        %1197 = vmatpush1.msra.mxu0 %v937
        %1198 = vmatprep.subr.mxu0 %v936
        %1199 = vmatpush1.msra.mxu0 %v935
        %1200 = vmatprep.subr.mxu0 %v934
        %1201 = vmatpush1.msra.mxu0 %v933
        %1202 = vmatprep.subr.mxu0 %v932
        %1203 = vmatpush1.msra.mxu0 %v931
        %1204 = vmatprep.subr.mxu0 %v930
        %1205 = vmatpush1.msra.mxu0 %v929
        %1206 = vmatprep.subr.mxu0 %v928
        %1207 = vmatpush1.msra.mxu0 %v927
        %1208 = vmatprep.subr.mxu0 %v926
        %1209 = vmatpush1.msra.mxu0 %v925
        %1210 = vmatprep.subr.mxu0 %v924
        %1211 = vmatpush1.msra.mxu0 %v923
        %1212 = vmatprep.subr.mxu0 %v922
        %1213 = vmatpush1.msra.mxu0 %v921
        %1214 = vmatprep.subr.mxu0 %v920
        %1215 = vmatpush1.msra.mxu0 %v919
        %1216 = vmatprep.subr.mxu0 %v918
        %1217 = vmatpush1.msra.mxu0 %v917
        %1218 = vmatprep.subr.mxu0 %v916
        %1219 = vmatpush1.msra.mxu0 %v915
        %1220 = vmatprep.subr.mxu0 %v914
        %1221 = vmatpush1.msra.mxu0 %v913
        %1222 = vmatprep.subr.mxu0 %v912
        %1223 = vmatpush1.msra.mxu0 %v911
        %1224 = vmatprep.subr.mxu0 0.0
        %1225 = vmatpush2.msra.mxu0 0.0
        %1226 = vmatprep.subr.mxu0 0.0
        %1227 = vmatpush2.msra.mxu0 0.0
        %1228 = vmatprep.subr.mxu0 0.0
        %1229 = vmatpush2.msra.mxu0 0.0
        %1230 = vmatprep.subr.mxu0 0.0
        %1231 = vmatpush2.msra.mxu0 0.0
        %1232 = vmatprep.subr.mxu0 0.0
        %1233 = vmatpush2.msra.mxu0 0.0
        %1234 = vmatprep.subr.mxu0 0.0
        %1235 = vmatpush2.msra.mxu0 0.0
        %1236 = vmatprep.subr.mxu0 0.0
        %1237 = vmatpush2.msra.mxu0 0.0
        %1238 = vmatprep.subr.mxu0 0.0
        %1239 = vmatpush2.msra.mxu0 0.0
        %1240 = vmatprep.subr.mxu0 %v958
        %1241 = vmatpush2.msra.mxu0 %v957
        %1242 = vmatprep.subr.mxu0 %v956
        %1243 = vmatpush2.msra.mxu0 %v955
        %1244 = vmatprep.subr.mxu0 %v954
        %1245 = vmatpush2.msra.mxu0 %v953
        %1246 = vmatprep.subr.mxu0 %v952
        %1247 = vmatpush2.msra.mxu0 %v951
        %1248 = vmatprep.subr.mxu0 %v950
        %1249 = vmatpush2.msra.mxu0 %v949
        %1250 = vmatprep.subr.mxu0 %v948
        %1251 = vmatpush2.msra.mxu0 %v947
        %1252 = vmatprep.subr.mxu0 %v946
        %1253 = vmatpush2.msra.mxu0 %v945
        %1254 = vmatprep.subr.mxu0 %v944
        %1255 = vmatpush2.msra.mxu0 %v943
        %1256 = vmatprep.mubr.f32.mxu0 %v1119
        %1257 = vmatmul.mubr.f32.gmra.mxu0 %v845
        %v1258 = vpop.f32.mrf.mxu0
        %v1259 = vadd.f32 %v1188, %v1258
        %v1260 = vpop.f32.mrf.mxu0
        %v1261 = vadd.f32 %v1190, %v1260
        %1262 = vdwg.mxu0
        %v1263 = vmax.f32 %v1259, 0.0
        %v1264 = vmax.f32 %v1261, 0.0
        %v1265 = vmax.f32 %v1116, %v1117
        %v1266 = vmax.f32 %v1263, %v1264
        %v1267 = vmax.f32 %v1265, %v1266
        %v1268 = vld [vmem:[#allocation9] sm:$0xff]
        %v1269 = vld [vmem:[#allocation9 + $0x8] sm:$0xff]
        %v1270 = vld [vmem:[#allocation9 + $0x10] sm:$0xff]
        %v1271 = vld [vmem:[#allocation9 + $0x18] sm:$0xff]
        %v1272 = vld [vmem:[#allocation9 + $0x20] sm:$0xff]
        %v1273 = vld [vmem:[#allocation9 + $0x28] sm:$0xff]
        %v1274 = vld [vmem:[#allocation9 + $0x30] sm:$0xff]
        %v1275 = vld [vmem:[#allocation9 + $0x38] sm:$0xff]
        %v1276 = vld [vmem:[#allocation9 + $0x40] sm:$0xff]
        %v1277 = vld [vmem:[#allocation9 + $0x48] sm:$0xff]
        %s1278 = scalar_lea.vmem [#allocation9], 80
        %v1279 = vld [vmem:[%s1278] sm:$0xff]
        %v1280 = vld [vmem:[%s1278 + $0x8] sm:$0xff]
        %v1281 = vld [vmem:[%s1278 + $0x10] sm:$0xff]
        %v1282 = vld [vmem:[%s1278 + $0x18] sm:$0xff]
        %v1283 = vld [vmem:[%s1278 + $0x20] sm:$0xff]
        %v1284 = vld [vmem:[%s1278 + $0x28] sm:$0xff]
        %v1285 = vld [vmem:[%s1278 + $0x30] sm:$0xff]
        %v1286 = vld [vmem:[%s1278 + $0x38] sm:$0xff]
        %v1287 = vld [vmem:[%s1278 + $0x40] sm:$0xff]
        %v1288 = vld [vmem:[%s1278 + $0x48] sm:$0xff]
        %v1290 = vrot.slane %v1267, 1
        %v1291 = vsel %vm823, %v1290, 0
        %1293 = vmatprep.subr.mxu0 0.0
        %1294 = vmatpush1.msra.mxu0 0.0
        %1295 = vmatprep.subr.mxu0 0.0
        %1296 = vmatpush1.msra.mxu0 0.0
        %1297 = vmatprep.subr.mxu0 0.0
        %1298 = vmatpush1.msra.mxu0 0.0
        %1299 = vmatprep.subr.mxu0 0.0
        %1300 = vmatpush1.msra.mxu0 0.0
        %1301 = vmatprep.subr.mxu0 0.0
        %1302 = vmatpush1.msra.mxu0 0.0
        %1303 = vmatprep.subr.mxu0 0.0
        %1304 = vmatpush1.msra.mxu0 0.0
        %1305 = vmatprep.subr.mxu0 0.0
        %1306 = vmatpush1.msra.mxu0 %v1288
        %1307 = vmatprep.subr.mxu0 0.0
        %1308 = vmatpush1.msra.mxu0 %v1287
        %1309 = vmatprep.subr.mxu0 0.0
        %1310 = vmatpush1.msra.mxu0 %v1286
        %1311 = vmatprep.subr.mxu0 0.0
        %1312 = vmatpush1.msra.mxu0 %v1285
        %1313 = vmatprep.subr.mxu0 0.0
        %1314 = vmatpush1.msra.mxu0 %v1284
        %1315 = vmatprep.subr.mxu0 0.0
        %1316 = vmatpush1.msra.mxu0 %v1283
        %1317 = vmatprep.subr.mxu0 0.0
        %1318 = vmatpush1.msra.mxu0 %v1282
        %1319 = vmatprep.subr.mxu0 0.0
        %1320 = vmatpush1.msra.mxu0 %v1281
        %1321 = vmatprep.subr.mxu0 0.0
        %1322 = vmatpush1.msra.mxu0 %v1280
        %1323 = vmatprep.subr.mxu0 0.0
        %1324 = vmatpush1.msra.mxu0 %v1279
        %1325 = vmatprep.subr.mxu0 0.0
        %1326 = vmatpush2.msra.mxu0 0.0
        %1327 = vmatprep.subr.mxu0 0.0
        %1328 = vmatpush2.msra.mxu0 0.0
        %1329 = vmatprep.subr.mxu0 0.0
        %1330 = vmatpush2.msra.mxu0 0.0
        %1331 = vmatprep.subr.mxu0 0.0
        %1332 = vmatpush2.msra.mxu0 0.0
        %1333 = vmatprep.subr.mxu0 0.0
        %1334 = vmatpush2.msra.mxu0 0.0
        %1335 = vmatprep.subr.mxu0 0.0
        %1336 = vmatpush2.msra.mxu0 0.0
        %1337 = vmatprep.subr.mxu0 0.0
        %1338 = vmatpush2.msra.mxu0 0.0
        %1339 = vmatprep.subr.mxu0 0.0
        %1340 = vmatpush2.msra.mxu0 0.0
        %1341 = vmatprep.subr.mxu0 0.0
        %1342 = vmatpush2.msra.mxu0 0.0
        %1343 = vmatprep.subr.mxu0 0.0
        %1344 = vmatpush2.msra.mxu0 0.0
        %1345 = vmatprep.subr.mxu0 0.0
        %1346 = vmatpush2.msra.mxu0 0.0
        %1347 = vmatprep.subr.mxu0 0.0
        %1348 = vmatpush2.msra.mxu0 0.0
        %1349 = vmatprep.subr.mxu0 0.0
        %1350 = vmatpush2.msra.mxu0 0.0
        %1351 = vmatprep.subr.mxu0 0.0
        %1352 = vmatpush2.msra.mxu0 0.0
        %1353 = vmatprep.subr.mxu0 0.0
        %1354 = vmatpush2.msra.mxu0 0.0
        %1355 = vmatprep.subr.mxu0 0.0
        %1356 = vmatpush2.msra.mxu0 0.0
        %1357 = vmatprep.mubr.f32.mxu0 0.0
        %1358 = vmatmul.mubr.f32.gmra.mxu0 %v1291
        %v1359 = vpop.f32.mrf.mxu0
        %v1360 = vadd.f32 0.0, %v1359
        %v1361 = vpop.f32.mrf.mxu0
        %1362 = vdwg.mxu0
        %v1363 = vsel %vm823, %v1267, 0
        %1365 = vmatprep.subr.mxu0 0.0
        %1366 = vmatpush1.msra.mxu0 0.0
        %1367 = vmatprep.subr.mxu0 0.0
        %1368 = vmatpush1.msra.mxu0 0.0
        %1369 = vmatprep.subr.mxu0 0.0
        %1370 = vmatpush1.msra.mxu0 0.0
        %1371 = vmatprep.subr.mxu0 0.0
        %1372 = vmatpush1.msra.mxu0 0.0
        %1373 = vmatprep.subr.mxu0 0.0
        %1374 = vmatpush1.msra.mxu0 0.0
        %1375 = vmatprep.subr.mxu0 0.0
        %1376 = vmatpush1.msra.mxu0 0.0
        %1377 = vmatprep.subr.mxu0 0.0
        %1378 = vmatpush1.msra.mxu0 %v1277
        %1379 = vmatprep.subr.mxu0 0.0
        %1380 = vmatpush1.msra.mxu0 %v1276
        %1381 = vmatprep.subr.mxu0 0.0
        %1382 = vmatpush1.msra.mxu0 %v1275
        %1383 = vmatprep.subr.mxu0 0.0
        %1384 = vmatpush1.msra.mxu0 %v1274
        %1385 = vmatprep.subr.mxu0 0.0
        %1386 = vmatpush1.msra.mxu0 %v1273
        %1387 = vmatprep.subr.mxu0 0.0
        %1388 = vmatpush1.msra.mxu0 %v1272
        %1389 = vmatprep.subr.mxu0 0.0
        %1390 = vmatpush1.msra.mxu0 %v1271
        %1391 = vmatprep.subr.mxu0 0.0
        %1392 = vmatpush1.msra.mxu0 %v1270
        %1393 = vmatprep.subr.mxu0 0.0
        %1394 = vmatpush1.msra.mxu0 %v1269
        %1395 = vmatprep.subr.mxu0 0.0
        %1396 = vmatpush1.msra.mxu0 %v1268
        %1397 = vmatprep.subr.mxu0 0.0
        %1398 = vmatpush2.msra.mxu0 0.0
        %1399 = vmatprep.subr.mxu0 0.0
        %1400 = vmatpush2.msra.mxu0 0.0
        %1401 = vmatprep.subr.mxu0 0.0
        %1402 = vmatpush2.msra.mxu0 0.0
        %1403 = vmatprep.subr.mxu0 0.0
        %1404 = vmatpush2.msra.mxu0 0.0
        %1405 = vmatprep.subr.mxu0 0.0
        %1406 = vmatpush2.msra.mxu0 0.0
        %1407 = vmatprep.subr.mxu0 0.0
        %1408 = vmatpush2.msra.mxu0 0.0
        %1409 = vmatprep.subr.mxu0 0.0
        %1410 = vmatpush2.msra.mxu0 0.0
        %1411 = vmatprep.subr.mxu0 0.0
        %1412 = vmatpush2.msra.mxu0 0.0
        %1413 = vmatprep.subr.mxu0 0.0
        %1414 = vmatpush2.msra.mxu0 0.0
        %1415 = vmatprep.subr.mxu0 0.0
        %1416 = vmatpush2.msra.mxu0 0.0
        %1417 = vmatprep.subr.mxu0 0.0
        %1418 = vmatpush2.msra.mxu0 0.0
        %1419 = vmatprep.subr.mxu0 0.0
        %1420 = vmatpush2.msra.mxu0 0.0
        %1421 = vmatprep.subr.mxu0 0.0
        %1422 = vmatpush2.msra.mxu0 0.0
        %1423 = vmatprep.subr.mxu0 0.0
        %1424 = vmatpush2.msra.mxu0 0.0
        %1425 = vmatprep.subr.mxu0 0.0
        %1426 = vmatpush2.msra.mxu0 0.0
        %1427 = vmatprep.subr.mxu0 0.0
        %1428 = vmatpush2.msra.mxu0 0.0
        %1429 = vmatprep.mubr.f32.mxu0 0.0
        %1430 = vmatmul.mubr.f32.gmra.mxu0 %v1363
        %v1431 = vpop.f32.mrf.mxu0
        %v1432 = vadd.f32 %v1360, %v1431
        %v1433 = vpop.f32.mrf.mxu0
        %1434 = vdwg.mxu0
        %s1435 = scalar_lea.vmem [#allocation9], 160
        %v1436 = vld [vmem:[%s1435] sm:$0xff]
        %v1437 = vld [vmem:[%s1435 + $0x8] sm:$0xff]
        %v1438 = vld [vmem:[%s1435 + $0x10] sm:$0xff]
        %v1439 = vld [vmem:[%s1435 + $0x18] sm:$0xff]
        %v1440 = vld [vmem:[%s1435 + $0x20] sm:$0xff]
        %v1441 = vld [vmem:[%s1435 + $0x28] sm:$0xff]
        %v1442 = vld [vmem:[%s1435 + $0x30] sm:$0xff]
        %v1443 = vld [vmem:[%s1435 + $0x38] sm:$0xff]
        %v1444 = vld [vmem:[%s1435 + $0x40] sm:$0xff]
        %v1445 = vld [vmem:[%s1435 + $0x48] sm:$0xff]
        %v1446 = vrot.slane %v1267, 2
        %v1447 = vsel %vm823, %v1446, 0
        %1449 = vmatprep.subr.mxu0 0.0
        %1450 = vmatpush1.msra.mxu0 0.0
        %1451 = vmatprep.subr.mxu0 0.0
        %1452 = vmatpush1.msra.mxu0 0.0
        %1453 = vmatprep.subr.mxu0 0.0
        %1454 = vmatpush1.msra.mxu0 0.0
        %1455 = vmatprep.subr.mxu0 0.0
        %1456 = vmatpush1.msra.mxu0 0.0
        %1457 = vmatprep.subr.mxu0 0.0
        %1458 = vmatpush1.msra.mxu0 0.0
        %1459 = vmatprep.subr.mxu0 0.0
        %1460 = vmatpush1.msra.mxu0 0.0
        %1461 = vmatprep.subr.mxu0 0.0
        %1462 = vmatpush1.msra.mxu0 %v1445
        %1463 = vmatprep.subr.mxu0 0.0
        %1464 = vmatpush1.msra.mxu0 %v1444
        %1465 = vmatprep.subr.mxu0 0.0
        %1466 = vmatpush1.msra.mxu0 %v1443
        %1467 = vmatprep.subr.mxu0 0.0
        %1468 = vmatpush1.msra.mxu0 %v1442
        %1469 = vmatprep.subr.mxu0 0.0
        %1470 = vmatpush1.msra.mxu0 %v1441
        %1471 = vmatprep.subr.mxu0 0.0
        %1472 = vmatpush1.msra.mxu0 %v1440
        %1473 = vmatprep.subr.mxu0 0.0
        %1474 = vmatpush1.msra.mxu0 %v1439
        %1475 = vmatprep.subr.mxu0 0.0
        %1476 = vmatpush1.msra.mxu0 %v1438
        %1477 = vmatprep.subr.mxu0 0.0
        %1478 = vmatpush1.msra.mxu0 %v1437
        %1479 = vmatprep.subr.mxu0 0.0
        %1480 = vmatpush1.msra.mxu0 %v1436
        %1481 = vmatprep.subr.mxu0 0.0
        %1482 = vmatpush2.msra.mxu0 0.0
        %1483 = vmatprep.subr.mxu0 0.0
        %1484 = vmatpush2.msra.mxu0 0.0
        %1485 = vmatprep.subr.mxu0 0.0
        %1486 = vmatpush2.msra.mxu0 0.0
        %1487 = vmatprep.subr.mxu0 0.0
        %1488 = vmatpush2.msra.mxu0 0.0
        %1489 = vmatprep.subr.mxu0 0.0
        %1490 = vmatpush2.msra.mxu0 0.0
        %1491 = vmatprep.subr.mxu0 0.0
        %1492 = vmatpush2.msra.mxu0 0.0
        %1493 = vmatprep.subr.mxu0 0.0
        %1494 = vmatpush2.msra.mxu0 0.0
        %1495 = vmatprep.subr.mxu0 0.0
        %1496 = vmatpush2.msra.mxu0 0.0
        %1497 = vmatprep.subr.mxu0 0.0
        %1498 = vmatpush2.msra.mxu0 0.0
        %1499 = vmatprep.subr.mxu0 0.0
        %1500 = vmatpush2.msra.mxu0 0.0
        %1501 = vmatprep.subr.mxu0 0.0
        %1502 = vmatpush2.msra.mxu0 0.0
        %1503 = vmatprep.subr.mxu0 0.0
        %1504 = vmatpush2.msra.mxu0 0.0
        %1505 = vmatprep.subr.mxu0 0.0
        %1506 = vmatpush2.msra.mxu0 0.0
        %1507 = vmatprep.subr.mxu0 0.0
        %1508 = vmatpush2.msra.mxu0 0.0
        %1509 = vmatprep.subr.mxu0 0.0
        %1510 = vmatpush2.msra.mxu0 0.0
        %1511 = vmatprep.subr.mxu0 0.0
        %1512 = vmatpush2.msra.mxu0 0.0
        %1513 = vmatprep.mubr.f32.mxu0 0.0
        %1514 = vmatmul.mubr.f32.gmra.mxu0 %v1447
        %v1515 = vpop.f32.mrf.mxu0
        %v1516 = vadd.f32 0.0, %v1515
        %v1517 = vpop.f32.mrf.mxu0
        %1518 = vdwg.mxu0
        %v1519 = vadd.f32 %v1432, %v1516
        %s1520 = scalar_lea.vmem [#allocation9], 240
        %v1521 = vld [vmem:[%s1520] sm:$0xff]
        %v1522 = vld [vmem:[%s1520 + $0x8] sm:$0xff]
        %v1523 = vld [vmem:[%s1520 + $0x10] sm:$0xff]
        %v1524 = vld [vmem:[%s1520 + $0x18] sm:$0xff]
        %v1525 = vld [vmem:[%s1520 + $0x20] sm:$0xff]
        %v1526 = vld [vmem:[%s1520 + $0x28] sm:$0xff]
        %v1527 = vld [vmem:[%s1520 + $0x30] sm:$0xff]
        %v1528 = vld [vmem:[%s1520 + $0x38] sm:$0xff]
        %v1529 = vld [vmem:[%s1520 + $0x40] sm:$0xff]
        %v1530 = vld [vmem:[%s1520 + $0x48] sm:$0xff]
        %v1531 = vrot.slane %v1267, 3
        %v1532 = vsel %vm823, %v1531, 0
        %1534 = vmatprep.subr.mxu0 0.0
        %1535 = vmatpush1.msra.mxu0 0.0
        %1536 = vmatprep.subr.mxu0 0.0
        %1537 = vmatpush1.msra.mxu0 0.0
        %1538 = vmatprep.subr.mxu0 0.0
        %1539 = vmatpush1.msra.mxu0 0.0
        %1540 = vmatprep.subr.mxu0 0.0
        %1541 = vmatpush1.msra.mxu0 0.0
        %1542 = vmatprep.subr.mxu0 0.0
        %1543 = vmatpush1.msra.mxu0 0.0
        %1544 = vmatprep.subr.mxu0 0.0
        %1545 = vmatpush1.msra.mxu0 0.0
        %1546 = vmatprep.subr.mxu0 0.0
        %1547 = vmatpush1.msra.mxu0 %v1530
        %1548 = vmatprep.subr.mxu0 0.0
        %1549 = vmatpush1.msra.mxu0 %v1529
        %1550 = vmatprep.subr.mxu0 0.0
        %1551 = vmatpush1.msra.mxu0 %v1528
        %1552 = vmatprep.subr.mxu0 0.0
        %1553 = vmatpush1.msra.mxu0 %v1527
        %1554 = vmatprep.subr.mxu0 0.0
        %1555 = vmatpush1.msra.mxu0 %v1526
        %1556 = vmatprep.subr.mxu0 0.0
        %1557 = vmatpush1.msra.mxu0 %v1525
        %1558 = vmatprep.subr.mxu0 0.0
        %1559 = vmatpush1.msra.mxu0 %v1524
        %1560 = vmatprep.subr.mxu0 0.0
        %1561 = vmatpush1.msra.mxu0 %v1523
        %1562 = vmatprep.subr.mxu0 0.0
        %1563 = vmatpush1.msra.mxu0 %v1522
        %1564 = vmatprep.subr.mxu0 0.0
        %1565 = vmatpush1.msra.mxu0 %v1521
        %1566 = vmatprep.subr.mxu0 0.0
        %1567 = vmatpush2.msra.mxu0 0.0
        %1568 = vmatprep.subr.mxu0 0.0
        %1569 = vmatpush2.msra.mxu0 0.0
        %1570 = vmatprep.subr.mxu0 0.0
        %1571 = vmatpush2.msra.mxu0 0.0
        %1572 = vmatprep.subr.mxu0 0.0
        %1573 = vmatpush2.msra.mxu0 0.0
        %1574 = vmatprep.subr.mxu0 0.0
        %1575 = vmatpush2.msra.mxu0 0.0
        %1576 = vmatprep.subr.mxu0 0.0
        %1577 = vmatpush2.msra.mxu0 0.0
        %1578 = vmatprep.subr.mxu0 0.0
        %1579 = vmatpush2.msra.mxu0 0.0
        %1580 = vmatprep.subr.mxu0 0.0
        %1581 = vmatpush2.msra.mxu0 0.0
        %1582 = vmatprep.subr.mxu0 0.0
        %1583 = vmatpush2.msra.mxu0 0.0
        %1584 = vmatprep.subr.mxu0 0.0
        %1585 = vmatpush2.msra.mxu0 0.0
        %1586 = vmatprep.subr.mxu0 0.0
        %1587 = vmatpush2.msra.mxu0 0.0
        %1588 = vmatprep.subr.mxu0 0.0
        %1589 = vmatpush2.msra.mxu0 0.0
        %1590 = vmatprep.subr.mxu0 0.0
        %1591 = vmatpush2.msra.mxu0 0.0
        %1592 = vmatprep.subr.mxu0 0.0
        %1593 = vmatpush2.msra.mxu0 0.0
        %1594 = vmatprep.subr.mxu0 0.0
        %1595 = vmatpush2.msra.mxu0 0.0
        %1596 = vmatprep.subr.mxu0 0.0
        %1597 = vmatpush2.msra.mxu0 0.0
        %1598 = vmatprep.mubr.f32.mxu0 0.0
        %1599 = vmatmul.mubr.f32.gmra.mxu0 %v1532
        %v1600 = vpop.f32.mrf.mxu0
        %v1601 = vadd.f32 0.0, %v1600
        %v1602 = vpop.f32.mrf.mxu0
        %1603 = vdwg.mxu0
        %v1604 = vadd.f32 %v1519, %v1601
        %s1605 = scalar_lea.vmem [#allocation9], 320
        %v1606 = vld [vmem:[%s1605] sm:$0xff]
        %v1607 = vld [vmem:[%s1605 + $0x8] sm:$0xff]
        %v1608 = vld [vmem:[%s1605 + $0x10] sm:$0xff]
        %v1609 = vld [vmem:[%s1605 + $0x18] sm:$0xff]
        %v1610 = vld [vmem:[%s1605 + $0x20] sm:$0xff]
        %v1611 = vld [vmem:[%s1605 + $0x28] sm:$0xff]
        %v1612 = vld [vmem:[%s1605 + $0x30] sm:$0xff]
        %v1613 = vld [vmem:[%s1605 + $0x38] sm:$0xff]
        %v1614 = vld [vmem:[%s1605 + $0x40] sm:$0xff]
        %v1615 = vld [vmem:[%s1605 + $0x48] sm:$0xff]
        %v1616 = vrot.slane %v1267, 4
        %v1617 = vsel %vm823, %v1616, 0
        %1619 = vmatprep.subr.mxu0 0.0
        %1620 = vmatpush1.msra.mxu0 0.0
        %1621 = vmatprep.subr.mxu0 0.0
        %1622 = vmatpush1.msra.mxu0 0.0
        %1623 = vmatprep.subr.mxu0 0.0
        %1624 = vmatpush1.msra.mxu0 0.0
        %1625 = vmatprep.subr.mxu0 0.0
        %1626 = vmatpush1.msra.mxu0 0.0
        %1627 = vmatprep.subr.mxu0 0.0
        %1628 = vmatpush1.msra.mxu0 0.0
        %1629 = vmatprep.subr.mxu0 0.0
        %1630 = vmatpush1.msra.mxu0 0.0
        %1631 = vmatprep.subr.mxu0 0.0
        %1632 = vmatpush1.msra.mxu0 %v1615
        %1633 = vmatprep.subr.mxu0 0.0
        %1634 = vmatpush1.msra.mxu0 %v1614
        %1635 = vmatprep.subr.mxu0 0.0
        %1636 = vmatpush1.msra.mxu0 %v1613
        %1637 = vmatprep.subr.mxu0 0.0
        %1638 = vmatpush1.msra.mxu0 %v1612
        %1639 = vmatprep.subr.mxu0 0.0
        %1640 = vmatpush1.msra.mxu0 %v1611
        %1641 = vmatprep.subr.mxu0 0.0
        %1642 = vmatpush1.msra.mxu0 %v1610
        %1643 = vmatprep.subr.mxu0 0.0
        %1644 = vmatpush1.msra.mxu0 %v1609
        %1645 = vmatprep.subr.mxu0 0.0
        %1646 = vmatpush1.msra.mxu0 %v1608
        %1647 = vmatprep.subr.mxu0 0.0
        %1648 = vmatpush1.msra.mxu0 %v1607
        %1649 = vmatprep.subr.mxu0 0.0
        %1650 = vmatpush1.msra.mxu0 %v1606
        %1651 = vmatprep.subr.mxu0 0.0
        %1652 = vmatpush2.msra.mxu0 0.0
        %1653 = vmatprep.subr.mxu0 0.0
        %1654 = vmatpush2.msra.mxu0 0.0
        %1655 = vmatprep.subr.mxu0 0.0
        %1656 = vmatpush2.msra.mxu0 0.0
        %1657 = vmatprep.subr.mxu0 0.0
        %1658 = vmatpush2.msra.mxu0 0.0
        %1659 = vmatprep.subr.mxu0 0.0
        %1660 = vmatpush2.msra.mxu0 0.0
        %1661 = vmatprep.subr.mxu0 0.0
        %1662 = vmatpush2.msra.mxu0 0.0
        %1663 = vmatprep.subr.mxu0 0.0
        %1664 = vmatpush2.msra.mxu0 0.0
        %1665 = vmatprep.subr.mxu0 0.0
        %1666 = vmatpush2.msra.mxu0 0.0
        %1667 = vmatprep.subr.mxu0 0.0
        %1668 = vmatpush2.msra.mxu0 0.0
        %1669 = vmatprep.subr.mxu0 0.0
        %1670 = vmatpush2.msra.mxu0 0.0
        %1671 = vmatprep.subr.mxu0 0.0
        %1672 = vmatpush2.msra.mxu0 0.0
        %1673 = vmatprep.subr.mxu0 0.0
        %1674 = vmatpush2.msra.mxu0 0.0
        %1675 = vmatprep.subr.mxu0 0.0
        %1676 = vmatpush2.msra.mxu0 0.0
        %1677 = vmatprep.subr.mxu0 0.0
        %1678 = vmatpush2.msra.mxu0 0.0
        %1679 = vmatprep.subr.mxu0 0.0
        %1680 = vmatpush2.msra.mxu0 0.0
        %1681 = vmatprep.subr.mxu0 0.0
        %1682 = vmatpush2.msra.mxu0 0.0
        %1683 = vmatprep.mubr.f32.mxu0 0.0
        %1684 = vmatmul.mubr.f32.gmra.mxu0 %v1617
        %v1685 = vpop.f32.mrf.mxu0
        %v1686 = vadd.f32 0.0, %v1685
        %v1687 = vpop.f32.mrf.mxu0
        %1688 = vdwg.mxu0
        %v1689 = vadd.f32 %v1604, %v1686
        %v1690 = vld [vmem:[%s6] sm:$0x1]
        %v1691 = vadd.f32 %v1689, %v1690
        %v1692 = vmax.f32 %v1691, 0.0
        %v1693 = vld [vmem:[#allocation11] sm:$0xff]
        %v1694 = vld [vmem:[#allocation11 + $0x8] sm:$0xff]
        %v1695 = vld [vmem:[#allocation11 + $0x10] sm:$0xff]
        %v1696 = vld [vmem:[#allocation11 + $0x18] sm:$0xff]
        %v1697 = vld [vmem:[#allocation11 + $0x20] sm:$0xff]
        %v1698 = vld [vmem:[#allocation11 + $0x28] sm:$0xff]
        %v1699 = vld [vmem:[#allocation11 + $0x30] sm:$0xff]
        %v1700 = vld [vmem:[#allocation11 + $0x38] sm:$0xff]
        %v1701 = vld [vmem:[#allocation11 + $0x40] sm:$0xff]
        %v1702 = vld [vmem:[#allocation11 + $0x48] sm:$0xff]
        %v1703 = vld [vmem:[#allocation11 + $0x50] sm:$0xff]
        %v1704 = vld [vmem:[#allocation11 + $0x58] sm:$0xff]
        %v1705 = vld [vmem:[#allocation11 + $0x60] sm:$0xff]
        %v1706 = vld [vmem:[#allocation11 + $0x68] sm:$0xff]
        %v1707 = vld [vmem:[#allocation11 + $0x70] sm:$0xff]
        %v1708 = vld [vmem:[#allocation11 + $0x78] sm:$0xff]
        %v1709 = vld [vmem:[%s8] sm:$0x1]
        %1710 = vmatprep.subr.mxu0 0.0
        %1711 = vmatpush1.msra.mxu0 %v1708
        %1712 = vmatprep.subr.mxu0 0.0
        %1713 = vmatpush1.msra.mxu0 %v1707
        %1714 = vmatprep.subr.mxu0 0.0
        %1715 = vmatpush1.msra.mxu0 %v1706
        %1716 = vmatprep.subr.mxu0 0.0
        %1717 = vmatpush1.msra.mxu0 %v1705
        %1718 = vmatprep.subr.mxu0 0.0
        %1719 = vmatpush1.msra.mxu0 %v1704
        %1720 = vmatprep.subr.mxu0 0.0
        %1721 = vmatpush1.msra.mxu0 %v1703
        %1722 = vmatprep.subr.mxu0 0.0
        %1723 = vmatpush1.msra.mxu0 %v1702
        %1724 = vmatprep.subr.mxu0 0.0
        %1725 = vmatpush1.msra.mxu0 %v1701
        %1726 = vmatprep.subr.mxu0 0.0
        %1727 = vmatpush1.msra.mxu0 %v1700
        %1728 = vmatprep.subr.mxu0 0.0
        %1729 = vmatpush1.msra.mxu0 %v1699
        %1730 = vmatprep.subr.mxu0 0.0
        %1731 = vmatpush1.msra.mxu0 %v1698
        %1732 = vmatprep.subr.mxu0 0.0
        %1733 = vmatpush1.msra.mxu0 %v1697
        %1734 = vmatprep.subr.mxu0 0.0
        %1735 = vmatpush1.msra.mxu0 %v1696
        %1736 = vmatprep.subr.mxu0 0.0
        %1737 = vmatpush1.msra.mxu0 %v1695
        %1738 = vmatprep.subr.mxu0 0.0
        %1739 = vmatpush1.msra.mxu0 %v1694
        %1740 = vmatprep.subr.mxu0 0.0
        %1741 = vmatpush1.msra.mxu0 %v1693
        %1742 = vmatprep.subr.mxu0 0.0
        %1743 = vmatpush2.msra.mxu0 0.0
        %1744 = vmatprep.subr.mxu0 0.0
        %1745 = vmatpush2.msra.mxu0 0.0
        %1746 = vmatprep.subr.mxu0 0.0
        %1747 = vmatpush2.msra.mxu0 0.0
        %1748 = vmatprep.subr.mxu0 0.0
        %1749 = vmatpush2.msra.mxu0 0.0
        %1750 = vmatprep.subr.mxu0 0.0
        %1751 = vmatpush2.msra.mxu0 0.0
        %1752 = vmatprep.subr.mxu0 0.0
        %1753 = vmatpush2.msra.mxu0 0.0
        %1754 = vmatprep.subr.mxu0 0.0
        %1755 = vmatpush2.msra.mxu0 0.0
        %1756 = vmatprep.subr.mxu0 0.0
        %1757 = vmatpush2.msra.mxu0 0.0
        %1758 = vmatprep.subr.mxu0 0.0
        %1759 = vmatpush2.msra.mxu0 0.0
        %1760 = vmatprep.subr.mxu0 0.0
        %1761 = vmatpush2.msra.mxu0 0.0
        %1762 = vmatprep.subr.mxu0 0.0
        %1763 = vmatpush2.msra.mxu0 0.0
        %1764 = vmatprep.subr.mxu0 0.0
        %1765 = vmatpush2.msra.mxu0 0.0
        %1766 = vmatprep.subr.mxu0 0.0
        %1767 = vmatpush2.msra.mxu0 0.0
        %1768 = vmatprep.subr.mxu0 0.0
        %1769 = vmatpush2.msra.mxu0 0.0
        %1770 = vmatprep.subr.mxu0 0.0
        %1771 = vmatpush2.msra.mxu0 0.0
        %1772 = vmatprep.subr.mxu0 0.0
        %1773 = vmatpush2.msra.mxu0 0.0
        %1774 = vmatprep.mubr.f32.mxu0 0.0
        %1775 = vmatmul.mubr.f32.gmra.mxu0 %v1692
        %v1776 = vpop.f32.mrf.mxu0
        %v1777 = vadd.f32 %v1709, %v1776
        %v1778 = vpop.f32.mrf.mxu0
        %1779 = vdwg.mxu0
        %v1780 = vmax.f32 %v1777, 0.0
        %v1781 = vld [vmem:[#allocation12] sm:$0xff]
        %v1782 = vld [vmem:[#allocation12 + $0x8] sm:$0xff]
        %v1783 = vld [vmem:[#allocation12 + $0x10] sm:$0xff]
        %v1784 = vld [vmem:[#allocation12 + $0x18] sm:$0xff]
        %v1785 = vld [vmem:[#allocation12 + $0x20] sm:$0xff]
        %v1786 = vld [vmem:[#allocation12 + $0x28] sm:$0xff]
        %v1787 = vld [vmem:[#allocation12 + $0x30] sm:$0xff]
        %v1788 = vld [vmem:[#allocation12 + $0x38] sm:$0xff]
        %v1789 = vld [vmem:[#allocation12 + $0x40] sm:$0xff]
        %v1790 = vld [vmem:[#allocation12 + $0x48] sm:$0xff]
        %v1791 = vld [vmem:[#allocation12 + $0x50] sm:$0xff]
        %v1792 = vld [vmem:[#allocation12 + $0x58] sm:$0xff]
        %v1793 = vld [vmem:[#allocation12 + $0x60] sm:$0xff]
        %v1794 = vld [vmem:[#allocation12 + $0x68] sm:$0xff]
        %v1795 = vld [vmem:[#allocation12 + $0x70] sm:$0xff]
        %v1796 = vld [vmem:[#allocation12 + $0x78] sm:$0xff]
        %v1797 = vld [vmem:[%s10] sm:$0x1]
        %1798 = vmatprep.subr.mxu0 0.0
        %1799 = vmatpush1.msra.mxu0 %v1796
        %1800 = vmatprep.subr.mxu0 0.0
        %1801 = vmatpush1.msra.mxu0 %v1795
        %1802 = vmatprep.subr.mxu0 0.0
        %1803 = vmatpush1.msra.mxu0 %v1794
        %1804 = vmatprep.subr.mxu0 0.0
        %1805 = vmatpush1.msra.mxu0 %v1793
        %1806 = vmatprep.subr.mxu0 0.0
        %1807 = vmatpush1.msra.mxu0 %v1792
        %1808 = vmatprep.subr.mxu0 0.0
        %1809 = vmatpush1.msra.mxu0 %v1791
        %1810 = vmatprep.subr.mxu0 0.0
        %1811 = vmatpush1.msra.mxu0 %v1790
        %1812 = vmatprep.subr.mxu0 0.0
        %1813 = vmatpush1.msra.mxu0 %v1789
        %1814 = vmatprep.subr.mxu0 0.0
        %1815 = vmatpush1.msra.mxu0 %v1788
        %1816 = vmatprep.subr.mxu0 0.0
        %1817 = vmatpush1.msra.mxu0 %v1787
        %1818 = vmatprep.subr.mxu0 0.0
        %1819 = vmatpush1.msra.mxu0 %v1786
        %1820 = vmatprep.subr.mxu0 0.0
        %1821 = vmatpush1.msra.mxu0 %v1785
        %1822 = vmatprep.subr.mxu0 0.0
        %1823 = vmatpush1.msra.mxu0 %v1784
        %1824 = vmatprep.subr.mxu0 0.0
        %1825 = vmatpush1.msra.mxu0 %v1783
        %1826 = vmatprep.subr.mxu0 0.0
        %1827 = vmatpush1.msra.mxu0 %v1782
        %1828 = vmatprep.subr.mxu0 0.0
        %1829 = vmatpush1.msra.mxu0 %v1781
        %1830 = vmatprep.subr.mxu0 0.0
        %1831 = vmatpush2.msra.mxu0 0.0
        %1832 = vmatprep.subr.mxu0 0.0
        %1833 = vmatpush2.msra.mxu0 0.0
        %1834 = vmatprep.subr.mxu0 0.0
        %1835 = vmatpush2.msra.mxu0 0.0
        %1836 = vmatprep.subr.mxu0 0.0
        %1837 = vmatpush2.msra.mxu0 0.0
        %1838 = vmatprep.subr.mxu0 0.0
        %1839 = vmatpush2.msra.mxu0 0.0
        %1840 = vmatprep.subr.mxu0 0.0
        %1841 = vmatpush2.msra.mxu0 0.0
        %1842 = vmatprep.subr.mxu0 0.0
        %1843 = vmatpush2.msra.mxu0 0.0
        %1844 = vmatprep.subr.mxu0 0.0
        %1845 = vmatpush2.msra.mxu0 0.0
        %1846 = vmatprep.subr.mxu0 0.0
        %1847 = vmatpush2.msra.mxu0 0.0
        %1848 = vmatprep.subr.mxu0 0.0
        %1849 = vmatpush2.msra.mxu0 0.0
        %1850 = vmatprep.subr.mxu0 0.0
        %1851 = vmatpush2.msra.mxu0 0.0
        %1852 = vmatprep.subr.mxu0 0.0
        %1853 = vmatpush2.msra.mxu0 0.0
        %1854 = vmatprep.subr.mxu0 0.0
        %1855 = vmatpush2.msra.mxu0 0.0
        %1856 = vmatprep.subr.mxu0 0.0
        %1857 = vmatpush2.msra.mxu0 0.0
        %1858 = vmatprep.subr.mxu0 0.0
        %1859 = vmatpush2.msra.mxu0 0.0
        %1860 = vmatprep.subr.mxu0 0.0
        %1861 = vmatpush2.msra.mxu0 0.0
        %1862 = vmatprep.mubr.f32.mxu0 0.0
        %1863 = vmatmul.mubr.f32.gmra.mxu0 %v1780
        %v1864 = vpop.f32.mrf.mxu0
        %v1865 = vadd.f32 %v1797, %v1864
        %v1866 = vpop.f32.mrf.mxu0
        %1867 = vdwg.mxu0
        %v1868 = vmax.f32 %v1865, 0.0
        %1869 = vst [vmem:[%s476] sm:$0x1] %v1868
        %s1870 = sand.u32 %s275, 1
        %s1871 = scalar_lea.sflag [#allocation5], %s1870
        %s1872 = sand.u32 %s275, 1
        %s1873 = scalar_lea.vmem [#allocation14], %s1872
        // Predicated region
        $region89: #{net_forward.1} parent=63 // pred_check
          %p1874 = pneg %p285
        $region90: #{net_forward.1} parent=63 // pred_check_branch
          %1876 = sbr.rel (%p1874) target = $region92
        $region91: #{net_forward.1} parent=63 // pred_region
          %s1878 = ssub.s32 16, 16
          %1879 = vsyncadd %s1871, %s1878
          %s1880 = smul.addr %s31, 16
          %s1881 = scalar_lea.hbm %s11, %s1880
          %s1883 = sshll.u32 %s1873, 4
          %s1884 = int_to_ptr.vmem [resolvable:$true] %s1883
          %1886 = dma.vmem_to_hbm [thread:$0]  %s1884, 16, %s1881, %s1871
        $region92: #{net_forward.1} parent=63 // pred_fallthru
          _
      $region64: #{net_forward.1} parent=5 // pred_fallthru
        _
      %p1887 = scmp.le.s32.totalorder 2, %s26
      // Predicated region
      $region93: #{net_forward.1} parent=5 // pred_check
        %p1888 = pneg %p1887
      $region94: #{net_forward.1} parent=5 // pred_check_branch
        %1890 = sbr.rel (%p1888) target = $region96
      $region95: #{net_forward.1} parent=5 // pred_region
        %s1891 = ssub.s32 %s26, 2
        // Predicated region
        $region97: #{net_forward.1} parent=95 // pred_check
          %p1892 = pneg %p291
        $region98: #{net_forward.1} parent=95 // pred_check_branch
          %1894 = sbr.rel (%p1892) target = $region100
        $region99: #{net_forward.1} parent=95 // pred_region
          %s1895 = sand.u32 %s276, 1
          %s1896 = scalar_lea.sflag [#allocation5], %s1895
          %s1897 = sand.u32 %s276, 1
          %s1898 = scalar_lea.vmem [#allocation14], %s1897
          %1899 = dma.done %s1896, 16
        $region100: #{net_forward.1} parent=95 // pred_fallthru
          _
      $region96: #{net_forward.1} parent=5 // pred_fallthru
        _
    $region6: #{net_forward.1} parent=1 // loop_footer
      %s30 = sadd.s32 1, %s26
    $region7: #{net_forward.1} parent=1 // loop_footer_branch
      %25 = sbr.rel target = $region3
    $region8: #{net_forward.1} parent=1 // loop_exit
      _
    %1900 = vsyncpa [#allocation4], 1
    %s1901 = scalar_lea.sflag [#allocation4], 1
    %1902 = vsyncpa %s1901, 1
    %1903 = vsyncpa [#allocation7], 1
    %1904 = vsyncpa [#allocation10], 1
    %1905 = vsyncpa [#allocation13], 1
    %1906 = vsyncpa [#allocation5], 1
    %s1907 = scalar_lea.sflag [#allocation5], 1
    %1908 = vsyncpa %s1907, 1

</llo_original>
